<compile_context>
chip_gen: v7x
topology: tpu7x:2x2x1
jax: 0.10.0
libtpu: 0.0.40
codegen_flags: <defaults>
</compile_context>

<pallas_src>
import functools

import jax
import jax.numpy as jnp
from jax.experimental import pallas as pl
from jax.experimental.pallas import tpu as pltpu

# ----- model dims (small, consistent with the module) -----------------------
B = 8            # batch_size
T = 8            # sequence length
E = 32           # bert hidden_size == embedding_dim
H = 32           # hidden_dim (== E so every LSTM layer-0 W_ih is (E, 4H))
L = 2            # no_layers
O = 8            # output_dim
VOCAB = 64


def _bert_rnn_kernel(ids_ref, emb_ref, h0_ref, c0_ref, wih0_ref, whh0_ref,
                     wcat_ref, b_ref, fcw_ref, fcb_ref,
                     out_ref, hn_ref, cn_ref,
                     *, num_layers, hidden, seq_len, batch, vocab):
    f32 = jnp.float32

    # ---- fused embedding lookup (BERT stand-in) via one-hot MXU matmul ----
    ids = ids_ref[...]                                            # (T*B, 1) int32
    vocab_iota = jax.lax.broadcasted_iota(jnp.int32,
                                          (seq_len * batch, vocab), 1)
    onehot = (ids == vocab_iota).astype(f32)                      # (T*B, V)
    emb_flat = jnp.dot(onehot, emb_ref[...],
                       preferred_element_type=f32)                # (T*B, E)

    # ---- layer-0 input projection batched over the whole sequence ----------
    gates0_pre = (jnp.dot(emb_flat, wih0_ref[...],
                          preferred_element_type=f32)
                  + b_ref[0])                                     # (T*B, 4H)

    # ---- recurrence: state carried in registers -----------------------------
    h = [h0_ref[l] for l in range(num_layers)]                    # (B, H) each
    c = [c0_ref[l] for l in range(num_layers)]

    def lstm_cell(gates, c_prev):
        # Two full-(B,4H)-vreg transcendentals, then cheap VPU slices/combines.
        sig = jax.nn.sigmoid(gates)                               # (B, 4H)
        th = jnp.tanh(gates)                                      # (B, 4H)
        i_g = sig[:, 0 * hidden:1 * hidden]
        f_g = sig[:, 1 * hidden:2 * hidden]
        o_g = sig[:, 3 * hidden:4 * hidden]
        g_g = th[:, 2 * hidden:3 * hidden]
        c_new = f_g * c_prev + i_g * g_g
        h_new = o_g * jnp.tanh(c_new)
        return h_new, c_new

    inp = h[num_layers - 1]
    for t in range(seq_len):                                      # unrolled (T=8)
        # layer 0: pre-projected input + recurrent matmul
        gates = (gates0_pre[t * batch:(t + 1) * batch, :]
                 + jnp.dot(h[0], whh0_ref[...], preferred_element_type=f32))
        h[0], c[0] = lstm_cell(gates, c[0])
        inp = h[0]
        # layers >= 1: single fused [x ; h] @ [W_ih ; W_hh] matmul
        for l in range(1, num_layers):
            xh = jnp.concatenate([inp, h[l]], axis=1)             # (B, 2H)
            gates = (jnp.dot(xh, wcat_ref[l - 1],
                             preferred_element_type=f32)
                     + b_ref[l])
            h[l], c[l] = lstm_cell(gates, c[l])
            inp = h[l]

    # ---- dropout(identity) -> fc -> softmax on the last timestep ------------
    logits = (jnp.dot(inp, fcw_ref[...], preferred_element_type=f32)
              + fcb_ref[...])                                     # (B, O)
    m = jnp.max(logits, axis=-1, keepdims=True)
    e = jnp.exp(logits - m)
    inv = pl.reciprocal(jnp.sum(e, axis=-1, keepdims=True), approx=False)
    out_ref[...] = (e * inv).astype(out_ref.dtype)

    for l in range(num_layers):
        hn_ref[l] = h[l].astype(hn_ref.dtype)
        cn_ref[l] = c[l].astype(cn_ref.dtype)


def _pallas_forward(ids_tm, emb_table, h0, c0, wih0, whh0, wcat, b, fc_w, fc_b):
    kernel = functools.partial(_bert_rnn_kernel, num_layers=L, hidden=H,
                               seq_len=T, batch=B, vocab=VOCAB)
    grid_spec = pltpu.PrefetchScalarGridSpec(
        num_scalar_prefetch=0,
        grid=(1,),
        in_specs=[
            pl.BlockSpec((T * B, 1), lambda i: (0, 0)),          # token ids (time-major)
            pl.BlockSpec((VOCAB, E), lambda i: (0, 0)),          # embedding table
            pl.BlockSpec((L, B, H), lambda i: (0, 0, 0)),        # h0
            pl.BlockSpec((L, B, H), lambda i: (0, 0, 0)),        # c0
            pl.BlockSpec((E, 4 * H), lambda i: (0, 0)),          # W_ih layer 0
            pl.BlockSpec((H, 4 * H), lambda i: (0, 0)),          # W_hh layer 0
            pl.BlockSpec((L - 1, 2 * H, 4 * H), lambda i: (0, 0, 0)),  # fused [W_ih;W_hh] l>=1
            pl.BlockSpec((L, 1, 4 * H), lambda i: (0, 0, 0)),    # b_ih + b_hh
            pl.BlockSpec((H, O), lambda i: (0, 0)),              # fc weight
            pl.BlockSpec((1, O), lambda i: (0, 0)),              # fc bias
        ],
        out_specs=[
            pl.BlockSpec((B, O), lambda i: (0, 0)),              # softmax(out[:, -1])
            pl.BlockSpec((L, B, H), lambda i: (0, 0, 0)),        # h_n
            pl.BlockSpec((L, B, H), lambda i: (0, 0, 0)),        # c_n
        ],
        scratch_shapes=[],
    )
    return pl.pallas_call(
        kernel,
        grid_spec=grid_spec,
        out_shape=(
            jax.ShapeDtypeStruct((B, O), jnp.float32),
            jax.ShapeDtypeStruct((L, B, H), jnp.float32),
            jax.ShapeDtypeStruct((L, B, H), jnp.float32),
        ),
        compiler_params=pltpu.CompilerParams(
            dimension_semantics=("arbitrary",)),
    )(ids_tm, emb_table, h0, c0, wih0, whh0, wcat, b, fc_w, fc_b)


def pack_params(emb_table, w_ih, w_hh, b, fc_w, fc_b):
    """One-time host-side repack into kernel layout (no per-step cost)."""
    wih0 = w_ih[0]                                               # (E, 4H)
    whh0 = w_hh[0]                                               # (H, 4H)
    wcat = jnp.concatenate([w_ih[1:], w_hh[1:]], axis=1)         # (L-1, 2H, 4H)
    return (emb_table, wih0, whh0, wcat, b, fc_w, fc_b)


def bert_plus_rnn_forward(packed_params, x_ids, hidden, attention_mask):
    """Mirrors BERT_PLUS_RNN.forward -> (out, (h_n, c_n))."""
    del attention_mask  # TODO(synk): mask unused with the embedding-only BERT stand-in
    emb_table, wih0, whh0, wcat, b, fc_w, fc_b = packed_params
    h0, c0 = hidden
    # Tiny (64-int) repack to time-major flat ids; the embedding gather itself
    # happens inside the kernel (no (T,B,E) HBM intermediate).
    ids_tm = x_ids.T.reshape(T * B, 1).astype(jnp.int32)
    out, h_n, c_n = _pallas_forward(ids_tm, emb_table, h0, c0,
                                    wih0, whh0, wcat, b, fc_w, fc_b)
    return out, (h_n, c_n)


# ----------------------------- pure-JAX reference ---------------------------
def reference_forward(params, x_ids, hidden):
    emb_table, w_ih, w_hh, b, fc_w, fc_b = params
    h0, c0 = hidden
    embedded = emb_table[x_ids]                                   # (B, T, E)
    h = [h0[l] for l in range(L)]
    c = [c0[l] for l in range(L)]
    last = None
    for t in range(T):
        inp = embedded[:, t, :]
        for l in range(L):
            gates = inp @ w_ih[l] + h[l] @ w_hh[l] + b[l]
            i_g = jax.nn.sigmoid(gates[:, 0 * H:1 * H])
            f_g = jax.nn.sigmoid(gates[:, 1 * H:2 * H])
            g_g = jnp.tanh(gates[:, 2 * H:3 * H])
            o_g = jax.nn.sigmoid(gates[:, 3 * H:4 * H])
            c[l] = f_g * c[l] + i_g * g_g
            h[l] = o_g * jnp.tanh(c[l])
            inp = h[l]
        last = inp
    logits = last @ fc_w + fc_b
    out = jax.nn.softmax(logits, axis=-1)
    return out, (jnp.stack(h), jnp.stack(c))


# ----------------------------------- main ------------------------------------
if __name__ == "__main__":
    key = jax.random.PRNGKey(0)
    ks = jax.random.split(key, 8)

    # Deterministic synthetic parameters (module __init__ shapes, pre-transposed).
    emb_table = jax.random.normal(ks[0], (VOCAB, E), jnp.float32) * 0.1
    w_ih = jax.random.normal(ks[1], (L, E, 4 * H), jnp.float32) * (1.0 / jnp.sqrt(H))
    w_hh = jax.random.normal(ks[2], (L, H, 4 * H), jnp.float32) * (1.0 / jnp.sqrt(H))
    b = jax.random.normal(ks[3], (L, 1, 4 * H), jnp.float32) * 0.1   # b_ih + b_hh combined
    fc_w = jax.random.normal(ks[4], (H, O), jnp.float32) * (1.0 / jnp.sqrt(H))
    fc_b = jax.random.normal(ks[5], (1, O), jnp.float32) * 0.1
    params = (emb_table, w_ih, w_hh, b, fc_w, fc_b)
    packed = pack_params(*params)

    # Inputs: token ids, attention mask, init_hidden-style zero states.
    x_ids = jax.random.randint(ks[6], (B, T), 0, VOCAB, dtype=jnp.int32)
    attention_mask = jnp.ones((B, T), dtype=jnp.int32)
    h0 = jnp.zeros((L, B, H), jnp.float32)
    c0 = jnp.zeros((L, B, H), jnp.float32)

    fwd = jax.jit(bert_plus_rnn_forward)
    out, (h_n, c_n) = fwd(packed, x_ids, (h0, c0), attention_mask)
    jax.block_until_ready((out, h_n, c_n))

    out_ref, (h_ref, c_ref) = reference_forward(params, x_ids, (h0, c0))
    assert jnp.allclose(out, out_ref, atol=1e-4, rtol=1e-4)
    assert jnp.allclose(h_n, h_ref, atol=1e-4, rtol=1e-4)
    assert jnp.allclose(c_n, c_ref, atol=1e-4, rtol=1e-4)

    print("KERNEL_OK")
</pallas_src>

<mosaic_0001>
module attributes {stable_mosaic.version = 11 : i64} {
  func.func @_bert_rnn_kernel(%arg0: i32, %arg1: memref<64x1xi32, #tpu.memory_space<vmem>>, %arg2: memref<64x32xf32, #tpu.memory_space<vmem>>, %arg3: memref<2x8x32xf32, #tpu.memory_space<vmem>>, %arg4: memref<2x8x32xf32, #tpu.memory_space<vmem>>, %arg5: memref<32x128xf32, #tpu.memory_space<vmem>>, %arg6: memref<32x128xf32, #tpu.memory_space<vmem>>, %arg7: memref<1x64x128xf32, #tpu.memory_space<vmem>>, %arg8: memref<2x1x128xf32, #tpu.memory_space<vmem>>, %arg9: memref<32x8xf32, #tpu.memory_space<vmem>>, %arg10: memref<1x8xf32, #tpu.memory_space<vmem>>, %arg11: memref<8x8xf32, #tpu.memory_space<vmem>>, %arg12: memref<2x8x32xf32, #tpu.memory_space<vmem>>, %arg13: memref<2x8x32xf32, #tpu.memory_space<vmem>>) attributes {dimension_semantics = [#tpu.dimension_semantics<arbitrary>], iteration_bounds = array<i64: 1>, scalar_prefetch = 0 : i64, scratch_operands = 0 : i64, tpu.core_type = #tpu.core_type<tc>, window_params = [{pipeline_mode = #tpu.pipeline_mode<synchronous>, transform_indices = @transform_0, window_bounds = array<i64: 64, 1>}, {pipeline_mode = #tpu.pipeline_mode<synchronous>, transform_indices = @transform_1, window_bounds = array<i64: 64, 32>}, {pipeline_mode = #tpu.pipeline_mode<synchronous>, transform_indices = @transform_2, window_bounds = array<i64: 2, 8, 32>}, {pipeline_mode = #tpu.pipeline_mode<synchronous>, transform_indices = @transform_3, window_bounds = array<i64: 2, 8, 32>}, {pipeline_mode = #tpu.pipeline_mode<synchronous>, transform_indices = @transform_4, window_bounds = array<i64: 32, 128>}, {pipeline_mode = #tpu.pipeline_mode<synchronous>, transform_indices = @transform_5, window_bounds = array<i64: 32, 128>}, {pipeline_mode = #tpu.pipeline_mode<synchronous>, transform_indices = @transform_6, window_bounds = array<i64: 1, 64, 128>}, {pipeline_mode = #tpu.pipeline_mode<synchronous>, transform_indices = @transform_7, window_bounds = array<i64: 2, 1, 128>}, {pipeline_mode = #tpu.pipeline_mode<synchronous>, transform_indices = @transform_8, window_bounds = array<i64: 32, 8>}, {pipeline_mode = #tpu.pipeline_mode<synchronous>, transform_indices = @transform_9, window_bounds = array<i64: 1, 8>}, {pipeline_mode = #tpu.pipeline_mode<synchronous>, transform_indices = @transform_10, window_bounds = array<i64: 8, 8>}, {pipeline_mode = #tpu.pipeline_mode<synchronous>, transform_indices = @transform_11, window_bounds = array<i64: 2, 8, 32>}, {pipeline_mode = #tpu.pipeline_mode<synchronous>, transform_indices = @transform_12, window_bounds = array<i64: 2, 8, 32>}]} {
    %c0 = arith.constant 0 : index
    %c0_0 = arith.constant 0 : index
    %0 = vector.load %arg1[%c0, %c0_0] : memref<64x1xi32, #tpu.memory_space<vmem>>, vector<64x1xi32>
    %1 = tpu.iota {dimensions = array<i32: 1>} : vector<64x64xi32>
    %2 = vector.broadcast %0 : vector<64x1xi32> to vector<64x64xi32>
    %3 = arith.cmpi eq, %2, %1 : vector<64x64xi32>
    %4 = arith.extui %3 : vector<64x64xi1> to vector<64x64xi32>
    %5 = arith.sitofp %4 : vector<64x64xi32> to vector<64x64xf32>
    %c0_1 = arith.constant 0 : index
    %c0_2 = arith.constant 0 : index
    %6 = vector.load %arg2[%c0_1, %c0_2] : memref<64x32xf32, #tpu.memory_space<vmem>>, vector<64x32xf32>
    %cst = arith.constant dense<0.000000e+00> : vector<64x32xf32>
    %7 = tpu.matmul %5, %6, %cst {dimension_numbers = #tpu.dot_dimension_numbers<[1], [0], [0], [1], [0, 0, 1, 1], [], []>} : vector<64x64xf32>, vector<64x32xf32>, vector<64x32xf32> -> vector<64x32xf32>
    %c0_3 = arith.constant 0 : index
    %c0_4 = arith.constant 0 : index
    %8 = vector.load %arg5[%c0_3, %c0_4] : memref<32x128xf32, #tpu.memory_space<vmem>>, vector<32x128xf32>
    %cst_5 = arith.constant dense<0.000000e+00> : vector<64x128xf32>
    %9 = tpu.matmul %7, %8, %cst_5 {dimension_numbers = #tpu.dot_dimension_numbers<[1], [0], [0], [1], [0, 0, 1, 1], [], []>} : vector<64x32xf32>, vector<32x128xf32>, vector<64x128xf32> -> vector<64x128xf32>
    %c0_6 = arith.constant 0 : index
    %c0_7 = arith.constant 0 : index
    %c0_8 = arith.constant 0 : index
    %10 = vector.load %arg8[%c0_6, %c0_7, %c0_8] : memref<2x1x128xf32, #tpu.memory_space<vmem>>, vector<1x1x128xf32>
    %11 = vector.shape_cast %10 : vector<1x1x128xf32> to vector<1x128xf32>
    %12 = vector.broadcast %11 : vector<1x128xf32> to vector<64x128xf32>
    %13 = arith.addf %9, %12 : vector<64x128xf32>
    %c0_9 = arith.constant 0 : index
    %c0_10 = arith.constant 0 : index
    %c0_11 = arith.constant 0 : index
    %14 = vector.load %arg3[%c0_9, %c0_10, %c0_11] : memref<2x8x32xf32, #tpu.memory_space<vmem>>, vector<1x8x32xf32>
    %15 = vector.shape_cast %14 : vector<1x8x32xf32> to vector<8x32xf32>
    %c1 = arith.constant 1 : index
    %c0_12 = arith.constant 0 : index
    %c0_13 = arith.constant 0 : index
    %16 = vector.load %arg3[%c1, %c0_12, %c0_13] : memref<2x8x32xf32, #tpu.memory_space<vmem>>, vector<1x8x32xf32>
    %17 = vector.shape_cast %16 : vector<1x8x32xf32> to vector<8x32xf32>
    %c0_14 = arith.constant 0 : index
    %c0_15 = arith.constant 0 : index
    %c0_16 = arith.constant 0 : index
    %18 = vector.load %arg4[%c0_14, %c0_15, %c0_16] : memref<2x8x32xf32, #tpu.memory_space<vmem>>, vector<1x8x32xf32>
    %19 = vector.shape_cast %18 : vector<1x8x32xf32> to vector<8x32xf32>
    %c1_17 = arith.constant 1 : index
    %c0_18 = arith.constant 0 : index
    %c0_19 = arith.constant 0 : index
    %20 = vector.load %arg4[%c1_17, %c0_18, %c0_19] : memref<2x8x32xf32, #tpu.memory_space<vmem>>, vector<1x8x32xf32>
    %21 = vector.shape_cast %20 : vector<1x8x32xf32> to vector<8x32xf32>
    %22 = vector.extract_strided_slice %13 {offsets = [0, 0], sizes = [8, 128], strides = [1, 1]} : vector<64x128xf32> to vector<8x128xf32>
    %c0_20 = arith.constant 0 : index
    %c0_21 = arith.constant 0 : index
    %23 = vector.load %arg6[%c0_20, %c0_21] : memref<32x128xf32, #tpu.memory_space<vmem>>, vector<32x128xf32>
    %cst_22 = arith.constant dense<0.000000e+00> : vector<8x128xf32>
    %24 = tpu.matmul %15, %23, %cst_22 {dimension_numbers = #tpu.dot_dimension_numbers<[1], [0], [0], [1], [0, 0, 1, 1], [], []>} : vector<8x32xf32>, vector<32x128xf32>, vector<8x128xf32> -> vector<8x128xf32>
    %25 = arith.addf %22, %24 : vector<8x128xf32>
    %26 = arith.negf %25 : vector<8x128xf32>
    %27 = math.exp %26 : vector<8x128xf32>
    %cst_23 = arith.constant 1.000000e+00 : f32
    %28 = vector.broadcast %cst_23 : f32 to vector<8x128xf32>
    %29 = arith.addf %28, %27 : vector<8x128xf32>
    %30 = arith.divf %28, %29 : vector<8x128xf32>
    %31 = math.tanh %25 : vector<8x128xf32>
    %32 = vector.extract_strided_slice %30 {offsets = [0, 0], sizes = [8, 32], strides = [1, 1]} : vector<8x128xf32> to vector<8x32xf32>
    %33 = vector.extract_strided_slice %30 {offsets = [0, 32], sizes = [8, 32], strides = [1, 1]} : vector<8x128xf32> to vector<8x32xf32>
    %34 = vector.extract_strided_slice %30 {offsets = [0, 96], sizes = [8, 32], strides = [1, 1]} : vector<8x128xf32> to vector<8x32xf32>
    %35 = vector.extract_strided_slice %31 {offsets = [0, 64], sizes = [8, 32], strides = [1, 1]} : vector<8x128xf32> to vector<8x32xf32>
    %36 = arith.mulf %33, %19 : vector<8x32xf32>
    %37 = arith.mulf %32, %35 : vector<8x32xf32>
    %38 = arith.addf %36, %37 : vector<8x32xf32>
    %39 = math.tanh %38 : vector<8x32xf32>
    %40 = arith.mulf %34, %39 : vector<8x32xf32>
    %41 = tpu.concatenate %40, %17 in 1 : vector<8x32xf32>, vector<8x32xf32> -> vector<8x64xf32>
    %c0_24 = arith.constant 0 : index
    %c0_25 = arith.constant 0 : index
    %c0_26 = arith.constant 0 : index
    %42 = vector.load %arg7[%c0_24, %c0_25, %c0_26] : memref<1x64x128xf32, #tpu.memory_space<vmem>>, vector<1x64x128xf32>
    %43 = vector.shape_cast %42 : vector<1x64x128xf32> to vector<64x128xf32>
    %cst_27 = arith.constant dense<0.000000e+00> : vector<8x128xf32>
    %44 = tpu.matmul %41, %43, %cst_27 {dimension_numbers = #tpu.dot_dimension_numbers<[1], [0], [0], [1], [0, 0, 1, 1], [], []>} : vector<8x64xf32>, vector<64x128xf32>, vector<8x128xf32> -> vector<8x128xf32>
    %c1_28 = arith.constant 1 : index
    %c0_29 = arith.constant 0 : index
    %c0_30 = arith.constant 0 : index
    %45 = vector.load %arg8[%c1_28, %c0_29, %c0_30] : memref<2x1x128xf32, #tpu.memory_space<vmem>>, vector<1x1x128xf32>
    %46 = vector.shape_cast %45 : vector<1x1x128xf32> to vector<1x128xf32>
    %47 = vector.broadcast %46 : vector<1x128xf32> to vector<8x128xf32>
    %48 = arith.addf %44, %47 : vector<8x128xf32>
    %49 = arith.negf %48 : vector<8x128xf32>
    %50 = math.exp %49 : vector<8x128xf32>
    %cst_31 = arith.constant 1.000000e+00 : f32
    %51 = vector.broadcast %cst_31 : f32 to vector<8x128xf32>
    %52 = arith.addf %51, %50 : vector<8x128xf32>
    %53 = arith.divf %51, %52 : vector<8x128xf32>
    %54 = math.tanh %48 : vector<8x128xf32>
    %55 = vector.extract_strided_slice %53 {offsets = [0, 0], sizes = [8, 32], strides = [1, 1]} : vector<8x128xf32> to vector<8x32xf32>
    %56 = vector.extract_strided_slice %53 {offsets = [0, 32], sizes = [8, 32], strides = [1, 1]} : vector<8x128xf32> to vector<8x32xf32>
    %57 = vector.extract_strided_slice %53 {offsets = [0, 96], sizes = [8, 32], strides = [1, 1]} : vector<8x128xf32> to vector<8x32xf32>
    %58 = vector.extract_strided_slice %54 {offsets = [0, 64], sizes = [8, 32], strides = [1, 1]} : vector<8x128xf32> to vector<8x32xf32>
    %59 = arith.mulf %56, %21 : vector<8x32xf32>
    %60 = arith.mulf %55, %58 : vector<8x32xf32>
    %61 = arith.addf %59, %60 : vector<8x32xf32>
    %62 = math.tanh %61 : vector<8x32xf32>
    %63 = arith.mulf %57, %62 : vector<8x32xf32>
    %64 = vector.extract_strided_slice %13 {offsets = [8, 0], sizes = [8, 128], strides = [1, 1]} : vector<64x128xf32> to vector<8x128xf32>
    %c0_32 = arith.constant 0 : index
    %c0_33 = arith.constant 0 : index
    %65 = vector.load %arg6[%c0_32, %c0_33] : memref<32x128xf32, #tpu.memory_space<vmem>>, vector<32x128xf32>
    %cst_34 = arith.constant dense<0.000000e+00> : vector<8x128xf32>
    %66 = tpu.matmul %40, %65, %cst_34 {dimension_numbers = #tpu.dot_dimension_numbers<[1], [0], [0], [1], [0, 0, 1, 1], [], []>} : vector<8x32xf32>, vector<32x128xf32>, vector<8x128xf32> -> vector<8x128xf32>
    %67 = arith.addf %64, %66 : vector<8x128xf32>
    %68 = arith.negf %67 : vector<8x128xf32>
    %69 = math.exp %68 : vector<8x128xf32>
    %cst_35 = arith.constant 1.000000e+00 : f32
    %70 = vector.broadcast %cst_35 : f32 to vector<8x128xf32>
    %71 = arith.addf %70, %69 : vector<8x128xf32>
    %72 = arith.divf %70, %71 : vector<8x128xf32>
    %73 = math.tanh %67 : vector<8x128xf32>
    %74 = vector.extract_strided_slice %72 {offsets = [0, 0], sizes = [8, 32], strides = [1, 1]} : vector<8x128xf32> to vector<8x32xf32>
    %75 = vector.extract_strided_slice %72 {offsets = [0, 32], sizes = [8, 32], strides = [1, 1]} : vector<8x128xf32> to vector<8x32xf32>
    %76 = vector.extract_strided_slice %72 {offsets = [0, 96], sizes = [8, 32], strides = [1, 1]} : vector<8x128xf32> to vector<8x32xf32>
    %77 = vector.extract_strided_slice %73 {offsets = [0, 64], sizes = [8, 32], strides = [1, 1]} : vector<8x128xf32> to vector<8x32xf32>
    %78 = arith.mulf %75, %38 : vector<8x32xf32>
    %79 = arith.mulf %74, %77 : vector<8x32xf32>
    %80 = arith.addf %78, %79 : vector<8x32xf32>
    %81 = math.tanh %80 : vector<8x32xf32>
    %82 = arith.mulf %76, %81 : vector<8x32xf32>
    %83 = tpu.concatenate %82, %63 in 1 : vector<8x32xf32>, vector<8x32xf32> -> vector<8x64xf32>
    %c0_36 = arith.constant 0 : index
    %c0_37 = arith.constant 0 : index
    %c0_38 = arith.constant 0 : index
    %84 = vector.load %arg7[%c0_36, %c0_37, %c0_38] : memref<1x64x128xf32, #tpu.memory_space<vmem>>, vector<1x64x128xf32>
    %85 = vector.shape_cast %84 : vector<1x64x128xf32> to vector<64x128xf32>
    %cst_39 = arith.constant dense<0.000000e+00> : vector<8x128xf32>
    %86 = tpu.matmul %83, %85, %cst_39 {dimension_numbers = #tpu.dot_dimension_numbers<[1], [0], [0], [1], [0, 0, 1, 1], [], []>} : vector<8x64xf32>, vector<64x128xf32>, vector<8x128xf32> -> vector<8x128xf32>
    %c1_40 = arith.constant 1 : index
    %c0_41 = arith.constant 0 : index
    %c0_42 = arith.constant 0 : index
    %87 = vector.load %arg8[%c1_40, %c0_41, %c0_42] : memref<2x1x128xf32, #tpu.memory_space<vmem>>, vector<1x1x128xf32>
    %88 = vector.shape_cast %87 : vector<1x1x128xf32> to vector<1x128xf32>
    %89 = vector.broadcast %88 : vector<1x128xf32> to vector<8x128xf32>
    %90 = arith.addf %86, %89 : vector<8x128xf32>
    %91 = arith.negf %90 : vector<8x128xf32>
    %92 = math.exp %91 : vector<8x128xf32>
    %cst_43 = arith.constant 1.000000e+00 : f32
    %93 = vector.broadcast %cst_43 : f32 to vector<8x128xf32>
    %94 = arith.addf %93, %92 : vector<8x128xf32>
    %95 = arith.divf %93, %94 : vector<8x128xf32>
    %96 = math.tanh %90 : vector<8x128xf32>
    %97 = vector.extract_strided_slice %95 {offsets = [0, 0], sizes = [8, 32], strides = [1, 1]} : vector<8x128xf32> to vector<8x32xf32>
    %98 = vector.extract_strided_slice %95 {offsets = [0, 32], sizes = [8, 32], strides = [1, 1]} : vector<8x128xf32> to vector<8x32xf32>
    %99 = vector.extract_strided_slice %95 {offsets = [0, 96], sizes = [8, 32], strides = [1, 1]} : vector<8x128xf32> to vector<8x32xf32>
    %100 = vector.extract_strided_slice %96 {offsets = [0, 64], sizes = [8, 32], strides = [1, 1]} : vector<8x128xf32> to vector<8x32xf32>
    %101 = arith.mulf %98, %61 : vector<8x32xf32>
    %102 = arith.mulf %97, %100 : vector<8x32xf32>
    %103 = arith.addf %101, %102 : vector<8x32xf32>
    %104 = math.tanh %103 : vector<8x32xf32>
    %105 = arith.mulf %99, %104 : vector<8x32xf32>
    %106 = vector.extract_strided_slice %13 {offsets = [16, 0], sizes = [8, 128], strides = [1, 1]} : vector<64x128xf32> to vector<8x128xf32>
    %c0_44 = arith.constant 0 : index
    %c0_45 = arith.constant 0 : index
    %107 = vector.load %arg6[%c0_44, %c0_45] : memref<32x128xf32, #tpu.memory_space<vmem>>, vector<32x128xf32>
    %cst_46 = arith.constant dense<0.000000e+00> : vector<8x128xf32>
    %108 = tpu.matmul %82, %107, %cst_46 {dimension_numbers = #tpu.dot_dimension_numbers<[1], [0], [0], [1], [0, 0, 1, 1], [], []>} : vector<8x32xf32>, vector<32x128xf32>, vector<8x128xf32> -> vector<8x128xf32>
    %109 = arith.addf %106, %108 : vector<8x128xf32>
    %110 = arith.negf %109 : vector<8x128xf32>
    %111 = math.exp %110 : vector<8x128xf32>
    %cst_47 = arith.constant 1.000000e+00 : f32
    %112 = vector.broadcast %cst_47 : f32 to vector<8x128xf32>
    %113 = arith.addf %112, %111 : vector<8x128xf32>
    %114 = arith.divf %112, %113 : vector<8x128xf32>
    %115 = math.tanh %109 : vector<8x128xf32>
    %116 = vector.extract_strided_slice %114 {offsets = [0, 0], sizes = [8, 32], strides = [1, 1]} : vector<8x128xf32> to vector<8x32xf32>
    %117 = vector.extract_strided_slice %114 {offsets = [0, 32], sizes = [8, 32], strides = [1, 1]} : vector<8x128xf32> to vector<8x32xf32>
    %118 = vector.extract_strided_slice %114 {offsets = [0, 96], sizes = [8, 32], strides = [1, 1]} : vector<8x128xf32> to vector<8x32xf32>
    %119 = vector.extract_strided_slice %115 {offsets = [0, 64], sizes = [8, 32], strides = [1, 1]} : vector<8x128xf32> to vector<8x32xf32>
    %120 = arith.mulf %117, %80 : vector<8x32xf32>
    %121 = arith.mulf %116, %119 : vector<8x32xf32>
    %122 = arith.addf %120, %121 : vector<8x32xf32>
    %123 = math.tanh %122 : vector<8x32xf32>
    %124 = arith.mulf %118, %123 : vector<8x32xf32>
    %125 = tpu.concatenate %124, %105 in 1 : vector<8x32xf32>, vector<8x32xf32> -> vector<8x64xf32>
    %c0_48 = arith.constant 0 : index
    %c0_49 = arith.constant 0 : index
    %c0_50 = arith.constant 0 : index
    %126 = vector.load %arg7[%c0_48, %c0_49, %c0_50] : memref<1x64x128xf32, #tpu.memory_space<vmem>>, vector<1x64x128xf32>
    %127 = vector.shape_cast %126 : vector<1x64x128xf32> to vector<64x128xf32>
    %cst_51 = arith.constant dense<0.000000e+00> : vector<8x128xf32>
    %128 = tpu.matmul %125, %127, %cst_51 {dimension_numbers = #tpu.dot_dimension_numbers<[1], [0], [0], [1], [0, 0, 1, 1], [], []>} : vector<8x64xf32>, vector<64x128xf32>, vector<8x128xf32> -> vector<8x128xf32>
    %c1_52 = arith.constant 1 : index
    %c0_53 = arith.constant 0 : index
    %c0_54 = arith.constant 0 : index
    %129 = vector.load %arg8[%c1_52, %c0_53, %c0_54] : memref<2x1x128xf32, #tpu.memory_space<vmem>>, vector<1x1x128xf32>
    %130 = vector.shape_cast %129 : vector<1x1x128xf32> to vector<1x128xf32>
    %131 = vector.broadcast %130 : vector<1x128xf32> to vector<8x128xf32>
    %132 = arith.addf %128, %131 : vector<8x128xf32>
    %133 = arith.negf %132 : vector<8x128xf32>
    %134 = math.exp %133 : vector<8x128xf32>
    %cst_55 = arith.constant 1.000000e+00 : f32
    %135 = vector.broadcast %cst_55 : f32 to vector<8x128xf32>
    %136 = arith.addf %135, %134 : vector<8x128xf32>
    %137 = arith.divf %135, %136 : vector<8x128xf32>
    %138 = math.tanh %132 : vector<8x128xf32>
    %139 = vector.extract_strided_slice %137 {offsets = [0, 0], sizes = [8, 32], strides = [1, 1]} : vector<8x128xf32> to vector<8x32xf32>
    %140 = vector.extract_strided_slice %137 {offsets = [0, 32], sizes = [8, 32], strides = [1, 1]} : vector<8x128xf32> to vector<8x32xf32>
    %141 = vector.extract_strided_slice %137 {offsets = [0, 96], sizes = [8, 32], strides = [1, 1]} : vector<8x128xf32> to vector<8x32xf32>
    %142 = vector.extract_strided_slice %138 {offsets = [0, 64], sizes = [8, 32], strides = [1, 1]} : vector<8x128xf32> to vector<8x32xf32>
    %143 = arith.mulf %140, %103 : vector<8x32xf32>
    %144 = arith.mulf %139, %142 : vector<8x32xf32>
    %145 = arith.addf %143, %144 : vector<8x32xf32>
    %146 = math.tanh %145 : vector<8x32xf32>
    %147 = arith.mulf %141, %146 : vector<8x32xf32>
    %148 = vector.extract_strided_slice %13 {offsets = [24, 0], sizes = [8, 128], strides = [1, 1]} : vector<64x128xf32> to vector<8x128xf32>
    %c0_56 = arith.constant 0 : index
    %c0_57 = arith.constant 0 : index
    %149 = vector.load %arg6[%c0_56, %c0_57] : memref<32x128xf32, #tpu.memory_space<vmem>>, vector<32x128xf32>
    %cst_58 = arith.constant dense<0.000000e+00> : vector<8x128xf32>
    %150 = tpu.matmul %124, %149, %cst_58 {dimension_numbers = #tpu.dot_dimension_numbers<[1], [0], [0], [1], [0, 0, 1, 1], [], []>} : vector<8x32xf32>, vector<32x128xf32>, vector<8x128xf32> -> vector<8x128xf32>
    %151 = arith.addf %148, %150 : vector<8x128xf32>
    %152 = arith.negf %151 : vector<8x128xf32>
    %153 = math.exp %152 : vector<8x128xf32>
    %cst_59 = arith.constant 1.000000e+00 : f32
    %154 = vector.broadcast %cst_59 : f32 to vector<8x128xf32>
    %155 = arith.addf %154, %153 : vector<8x128xf32>
    %156 = arith.divf %154, %155 : vector<8x128xf32>
    %157 = math.tanh %151 : vector<8x128xf32>
    %158 = vector.extract_strided_slice %156 {offsets = [0, 0], sizes = [8, 32], strides = [1, 1]} : vector<8x128xf32> to vector<8x32xf32>
    %159 = vector.extract_strided_slice %156 {offsets = [0, 32], sizes = [8, 32], strides = [1, 1]} : vector<8x128xf32> to vector<8x32xf32>
    %160 = vector.extract_strided_slice %156 {offsets = [0, 96], sizes = [8, 32], strides = [1, 1]} : vector<8x128xf32> to vector<8x32xf32>
    %161 = vector.extract_strided_slice %157 {offsets = [0, 64], sizes = [8, 32], strides = [1, 1]} : vector<8x128xf32> to vector<8x32xf32>
    %162 = arith.mulf %159, %122 : vector<8x32xf32>
    %163 = arith.mulf %158, %161 : vector<8x32xf32>
    %164 = arith.addf %162, %163 : vector<8x32xf32>
    %165 = math.tanh %164 : vector<8x32xf32>
    %166 = arith.mulf %160, %165 : vector<8x32xf32>
    %167 = tpu.concatenate %166, %147 in 1 : vector<8x32xf32>, vector<8x32xf32> -> vector<8x64xf32>
    %c0_60 = arith.constant 0 : index
    %c0_61 = arith.constant 0 : index
    %c0_62 = arith.constant 0 : index
    %168 = vector.load %arg7[%c0_60, %c0_61, %c0_62] : memref<1x64x128xf32, #tpu.memory_space<vmem>>, vector<1x64x128xf32>
    %169 = vector.shape_cast %168 : vector<1x64x128xf32> to vector<64x128xf32>
    %cst_63 = arith.constant dense<0.000000e+00> : vector<8x128xf32>
    %170 = tpu.matmul %167, %169, %cst_63 {dimension_numbers = #tpu.dot_dimension_numbers<[1], [0], [0], [1], [0, 0, 1, 1], [], []>} : vector<8x64xf32>, vector<64x128xf32>, vector<8x128xf32> -> vector<8x128xf32>
    %c1_64 = arith.constant 1 : index
    %c0_65 = arith.constant 0 : index
    %c0_66 = arith.constant 0 : index
    %171 = vector.load %arg8[%c1_64, %c0_65, %c0_66] : memref<2x1x128xf32, #tpu.memory_space<vmem>>, vector<1x1x128xf32>
    %172 = vector.shape_cast %171 : vector<1x1x128xf32> to vector<1x128xf32>
    %173 = vector.broadcast %172 : vector<1x128xf32> to vector<8x128xf32>
    %174 = arith.addf %170, %173 : vector<8x128xf32>
    %175 = arith.negf %174 : vector<8x128xf32>
    %176 = math.exp %175 : vector<8x128xf32>
    %cst_67 = arith.constant 1.000000e+00 : f32
    %177 = vector.broadcast %cst_67 : f32 to vector<8x128xf32>
    %178 = arith.addf %177, %176 : vector<8x128xf32>
    %179 = arith.divf %177, %178 : vector<8x128xf32>
    %180 = math.tanh %174 : vector<8x128xf32>
    %181 = vector.extract_strided_slice %179 {offsets = [0, 0], sizes = [8, 32], strides = [1, 1]} : vector<8x128xf32> to vector<8x32xf32>
    %182 = vector.extract_strided_slice %179 {offsets = [0, 32], sizes = [8, 32], strides = [1, 1]} : vector<8x128xf32> to vector<8x32xf32>
    %183 = vector.extract_strided_slice %179 {offsets = [0, 96], sizes = [8, 32], strides = [1, 1]} : vector<8x128xf32> to vector<8x32xf32>
    %184 = vector.extract_strided_slice %180 {offsets = [0, 64], sizes = [8, 32], strides = [1, 1]} : vector<8x128xf32> to vector<8x32xf32>
    %185 = arith.mulf %182, %145 : vector<8x32xf32>
    %186 = arith.mulf %181, %184 : vector<8x32xf32>
    %187 = arith.addf %185, %186 : vector<8x32xf32>
    %188 = math.tanh %187 : vector<8x32xf32>
    %189 = arith.mulf %183, %188 : vector<8x32xf32>
    %190 = vector.extract_strided_slice %13 {offsets = [32, 0], sizes = [8, 128], strides = [1, 1]} : vector<64x128xf32> to vector<8x128xf32>
    %c0_68 = arith.constant 0 : index
    %c0_69 = arith.constant 0 : index
    %191 = vector.load %arg6[%c0_68, %c0_69] : memref<32x128xf32, #tpu.memory_space<vmem>>, vector<32x128xf32>
    %cst_70 = arith.constant dense<0.000000e+00> : vector<8x128xf32>
    %192 = tpu.matmul %166, %191, %cst_70 {dimension_numbers = #tpu.dot_dimension_numbers<[1], [0], [0], [1], [0, 0, 1, 1], [], []>} : vector<8x32xf32>, vector<32x128xf32>, vector<8x128xf32> -> vector<8x128xf32>
    %193 = arith.addf %190, %192 : vector<8x128xf32>
    %194 = arith.negf %193 : vector<8x128xf32>
    %195 = math.exp %194 : vector<8x128xf32>
    %cst_71 = arith.constant 1.000000e+00 : f32
    %196 = vector.broadcast %cst_71 : f32 to vector<8x128xf32>
    %197 = arith.addf %196, %195 : vector<8x128xf32>
    %198 = arith.divf %196, %197 : vector<8x128xf32>
    %199 = math.tanh %193 : vector<8x128xf32>
    %200 = vector.extract_strided_slice %198 {offsets = [0, 0], sizes = [8, 32], strides = [1, 1]} : vector<8x128xf32> to vector<8x32xf32>
    %201 = vector.extract_strided_slice %198 {offsets = [0, 32], sizes = [8, 32], strides = [1, 1]} : vector<8x128xf32> to vector<8x32xf32>
    %202 = vector.extract_strided_slice %198 {offsets = [0, 96], sizes = [8, 32], strides = [1, 1]} : vector<8x128xf32> to vector<8x32xf32>
    %203 = vector.extract_strided_slice %199 {offsets = [0, 64], sizes = [8, 32], strides = [1, 1]} : vector<8x128xf32> to vector<8x32xf32>
    %204 = arith.mulf %201, %164 : vector<8x32xf32>
    %205 = arith.mulf %200, %203 : vector<8x32xf32>
    %206 = arith.addf %204, %205 : vector<8x32xf32>
    %207 = math.tanh %206 : vector<8x32xf32>
    %208 = arith.mulf %202, %207 : vector<8x32xf32>
    %209 = tpu.concatenate %208, %189 in 1 : vector<8x32xf32>, vector<8x32xf32> -> vector<8x64xf32>
    %c0_72 = arith.constant 0 : index
    %c0_73 = arith.constant 0 : index
    %c0_74 = arith.constant 0 : index
    %210 = vector.load %arg7[%c0_72, %c0_73, %c0_74] : memref<1x64x128xf32, #tpu.memory_space<vmem>>, vector<1x64x128xf32>
    %211 = vector.shape_cast %210 : vector<1x64x128xf32> to vector<64x128xf32>
    %cst_75 = arith.constant dense<0.000000e+00> : vector<8x128xf32>
    %212 = tpu.matmul %209, %211, %cst_75 {dimension_numbers = #tpu.dot_dimension_numbers<[1], [0], [0], [1], [0, 0, 1, 1], [], []>} : vector<8x64xf32>, vector<64x128xf32>, vector<8x128xf32> -> vector<8x128xf32>
    %c1_76 = arith.constant 1 : index
    %c0_77 = arith.constant 0 : index
    %c0_78 = arith.constant 0 : index
    %213 = vector.load %arg8[%c1_76, %c0_77, %c0_78] : memref<2x1x128xf32, #tpu.memory_space<vmem>>, vector<1x1x128xf32>
    %214 = vector.shape_cast %213 : vector<1x1x128xf32> to vector<1x128xf32>
    %215 = vector.broadcast %214 : vector<1x128xf32> to vector<8x128xf32>
    %216 = arith.addf %212, %215 : vector<8x128xf32>
    %217 = arith.negf %216 : vector<8x128xf32>
    %218 = math.exp %217 : vector<8x128xf32>
    %cst_79 = arith.constant 1.000000e+00 : f32
    %219 = vector.broadcast %cst_79 : f32 to vector<8x128xf32>
    %220 = arith.addf %219, %218 : vector<8x128xf32>
    %221 = arith.divf %219, %220 : vector<8x128xf32>
    %222 = math.tanh %216 : vector<8x128xf32>
    %223 = vector.extract_strided_slice %221 {offsets = [0, 0], sizes = [8, 32], strides = [1, 1]} : vector<8x128xf32> to vector<8x32xf32>
    %224 = vector.extract_strided_slice %221 {offsets = [0, 32], sizes = [8, 32], strides = [1, 1]} : vector<8x128xf32> to vector<8x32xf32>
    %225 = vector.extract_strided_slice %221 {offsets = [0, 96], sizes = [8, 32], strides = [1, 1]} : vector<8x128xf32> to vector<8x32xf32>
    %226 = vector.extract_strided_slice %222 {offsets = [0, 64], sizes = [8, 32], strides = [1, 1]} : vector<8x128xf32> to vector<8x32xf32>
    %227 = arith.mulf %224, %187 : vector<8x32xf32>
    %228 = arith.mulf %223, %226 : vector<8x32xf32>
    %229 = arith.addf %227, %228 : vector<8x32xf32>
    %230 = math.tanh %229 : vector<8x32xf32>
    %231 = arith.mulf %225, %230 : vector<8x32xf32>
    %232 = vector.extract_strided_slice %13 {offsets = [40, 0], sizes = [8, 128], strides = [1, 1]} : vector<64x128xf32> to vector<8x128xf32>
    %c0_80 = arith.constant 0 : index
    %c0_81 = arith.constant 0 : index
    %233 = vector.load %arg6[%c0_80, %c0_81] : memref<32x128xf32, #tpu.memory_space<vmem>>, vector<32x128xf32>
    %cst_82 = arith.constant dense<0.000000e+00> : vector<8x128xf32>
    %234 = tpu.matmul %208, %233, %cst_82 {dimension_numbers = #tpu.dot_dimension_numbers<[1], [0], [0], [1], [0, 0, 1, 1], [], []>} : vector<8x32xf32>, vector<32x128xf32>, vector<8x128xf32> -> vector<8x128xf32>
    %235 = arith.addf %232, %234 : vector<8x128xf32>
    %236 = arith.negf %235 : vector<8x128xf32>
    %237 = math.exp %236 : vector<8x128xf32>
    %cst_83 = arith.constant 1.000000e+00 : f32
    %238 = vector.broadcast %cst_83 : f32 to vector<8x128xf32>
    %239 = arith.addf %238, %237 : vector<8x128xf32>
    %240 = arith.divf %238, %239 : vector<8x128xf32>
    %241 = math.tanh %235 : vector<8x128xf32>
    %242 = vector.extract_strided_slice %240 {offsets = [0, 0], sizes = [8, 32], strides = [1, 1]} : vector<8x128xf32> to vector<8x32xf32>
    %243 = vector.extract_strided_slice %240 {offsets = [0, 32], sizes = [8, 32], strides = [1, 1]} : vector<8x128xf32> to vector<8x32xf32>
    %244 = vector.extract_strided_slice %240 {offsets = [0, 96], sizes = [8, 32], strides = [1, 1]} : vector<8x128xf32> to vector<8x32xf32>
    %245 = vector.extract_strided_slice %241 {offsets = [0, 64], sizes = [8, 32], strides = [1, 1]} : vector<8x128xf32> to vector<8x32xf32>
    %246 = arith.mulf %243, %206 : vector<8x32xf32>
    %247 = arith.mulf %242, %245 : vector<8x32xf32>
    %248 = arith.addf %246, %247 : vector<8x32xf32>
    %249 = math.tanh %248 : vector<8x32xf32>
    %250 = arith.mulf %244, %249 : vector<8x32xf32>
    %251 = tpu.concatenate %250, %231 in 1 : vector<8x32xf32>, vector<8x32xf32> -> vector<8x64xf32>
    %c0_84 = arith.constant 0 : index
    %c0_85 = arith.constant 0 : index
    %c0_86 = arith.constant 0 : index
    %252 = vector.load %arg7[%c0_84, %c0_85, %c0_86] : memref<1x64x128xf32, #tpu.memory_space<vmem>>, vector<1x64x128xf32>
    %253 = vector.shape_cast %252 : vector<1x64x128xf32> to vector<64x128xf32>
    %cst_87 = arith.constant dense<0.000000e+00> : vector<8x128xf32>
    %254 = tpu.matmul %251, %253, %cst_87 {dimension_numbers = #tpu.dot_dimension_numbers<[1], [0], [0], [1], [0, 0, 1, 1], [], []>} : vector<8x64xf32>, vector<64x128xf32>, vector<8x128xf32> -> vector<8x128xf32>
    %c1_88 = arith.constant 1 : index
    %c0_89 = arith.constant 0 : index
    %c0_90 = arith.constant 0 : index
    %255 = vector.load %arg8[%c1_88, %c0_89, %c0_90] : memref<2x1x128xf32, #tpu.memory_space<vmem>>, vector<1x1x128xf32>
    %256 = vector.shape_cast %255 : vector<1x1x128xf32> to vector<1x128xf32>
    %257 = vector.broadcast %256 : vector<1x128xf32> to vector<8x128xf32>
    %258 = arith.addf %254, %257 : vector<8x128xf32>
    %259 = arith.negf %258 : vector<8x128xf32>
    %260 = math.exp %259 : vector<8x128xf32>
    %cst_91 = arith.constant 1.000000e+00 : f32
    %261 = vector.broadcast %cst_91 : f32 to vector<8x128xf32>
    %262 = arith.addf %261, %260 : vector<8x128xf32>
    %263 = arith.divf %261, %262 : vector<8x128xf32>
    %264 = math.tanh %258 : vector<8x128xf32>
    %265 = vector.extract_strided_slice %263 {offsets = [0, 0], sizes = [8, 32], strides = [1, 1]} : vector<8x128xf32> to vector<8x32xf32>
    %266 = vector.extract_strided_slice %263 {offsets = [0, 32], sizes = [8, 32], strides = [1, 1]} : vector<8x128xf32> to vector<8x32xf32>
    %267 = vector.extract_strided_slice %263 {offsets = [0, 96], sizes = [8, 32], strides = [1, 1]} : vector<8x128xf32> to vector<8x32xf32>
    %268 = vector.extract_strided_slice %264 {offsets = [0, 64], sizes = [8, 32], strides = [1, 1]} : vector<8x128xf32> to vector<8x32xf32>
    %269 = arith.mulf %266, %229 : vector<8x32xf32>
    %270 = arith.mulf %265, %268 : vector<8x32xf32>
    %271 = arith.addf %269, %270 : vector<8x32xf32>
    %272 = math.tanh %271 : vector<8x32xf32>
    %273 = arith.mulf %267, %272 : vector<8x32xf32>
    %274 = vector.extract_strided_slice %13 {offsets = [48, 0], sizes = [8, 128], strides = [1, 1]} : vector<64x128xf32> to vector<8x128xf32>
    %c0_92 = arith.constant 0 : index
    %c0_93 = arith.constant 0 : index
    %275 = vector.load %arg6[%c0_92, %c0_93] : memref<32x128xf32, #tpu.memory_space<vmem>>, vector<32x128xf32>
    %cst_94 = arith.constant dense<0.000000e+00> : vector<8x128xf32>
    %276 = tpu.matmul %250, %275, %cst_94 {dimension_numbers = #tpu.dot_dimension_numbers<[1], [0], [0], [1], [0, 0, 1, 1], [], []>} : vector<8x32xf32>, vector<32x128xf32>, vector<8x128xf32> -> vector<8x128xf32>
    %277 = arith.addf %274, %276 : vector<8x128xf32>
    %278 = arith.negf %277 : vector<8x128xf32>
    %279 = math.exp %278 : vector<8x128xf32>
    %cst_95 = arith.constant 1.000000e+00 : f32
    %280 = vector.broadcast %cst_95 : f32 to vector<8x128xf32>
    %281 = arith.addf %280, %279 : vector<8x128xf32>
    %282 = arith.divf %280, %281 : vector<8x128xf32>
    %283 = math.tanh %277 : vector<8x128xf32>
    %284 = vector.extract_strided_slice %282 {offsets = [0, 0], sizes = [8, 32], strides = [1, 1]} : vector<8x128xf32> to vector<8x32xf32>
    %285 = vector.extract_strided_slice %282 {offsets = [0, 32], sizes = [8, 32], strides = [1, 1]} : vector<8x128xf32> to vector<8x32xf32>
    %286 = vector.extract_strided_slice %282 {offsets = [0, 96], sizes = [8, 32], strides = [1, 1]} : vector<8x128xf32> to vector<8x32xf32>
    %287 = vector.extract_strided_slice %283 {offsets = [0, 64], sizes = [8, 32], strides = [1, 1]} : vector<8x128xf32> to vector<8x32xf32>
    %288 = arith.mulf %285, %248 : vector<8x32xf32>
    %289 = arith.mulf %284, %287 : vector<8x32xf32>
    %290 = arith.addf %288, %289 : vector<8x32xf32>
    %291 = math.tanh %290 : vector<8x32xf32>
    %292 = arith.mulf %286, %291 : vector<8x32xf32>
    %293 = tpu.concatenate %292, %273 in 1 : vector<8x32xf32>, vector<8x32xf32> -> vector<8x64xf32>
    %c0_96 = arith.constant 0 : index
    %c0_97 = arith.constant 0 : index
    %c0_98 = arith.constant 0 : index
    %294 = vector.load %arg7[%c0_96, %c0_97, %c0_98] : memref<1x64x128xf32, #tpu.memory_space<vmem>>, vector<1x64x128xf32>
    %295 = vector.shape_cast %294 : vector<1x64x128xf32> to vector<64x128xf32>
    %cst_99 = arith.constant dense<0.000000e+00> : vector<8x128xf32>
    %296 = tpu.matmul %293, %295, %cst_99 {dimension_numbers = #tpu.dot_dimension_numbers<[1], [0], [0], [1], [0, 0, 1, 1], [], []>} : vector<8x64xf32>, vector<64x128xf32>, vector<8x128xf32> -> vector<8x128xf32>
    %c1_100 = arith.constant 1 : index
    %c0_101 = arith.constant 0 : index
    %c0_102 = arith.constant 0 : index
    %297 = vector.load %arg8[%c1_100, %c0_101, %c0_102] : memref<2x1x128xf32, #tpu.memory_space<vmem>>, vector<1x1x128xf32>
    %298 = vector.shape_cast %297 : vector<1x1x128xf32> to vector<1x128xf32>
    %299 = vector.broadcast %298 : vector<1x128xf32> to vector<8x128xf32>
    %300 = arith.addf %296, %299 : vector<8x128xf32>
    %301 = arith.negf %300 : vector<8x128xf32>
    %302 = math.exp %301 : vector<8x128xf32>
    %cst_103 = arith.constant 1.000000e+00 : f32
    %303 = vector.broadcast %cst_103 : f32 to vector<8x128xf32>
    %304 = arith.addf %303, %302 : vector<8x128xf32>
    %305 = arith.divf %303, %304 : vector<8x128xf32>
    %306 = math.tanh %300 : vector<8x128xf32>
    %307 = vector.extract_strided_slice %305 {offsets = [0, 0], sizes = [8, 32], strides = [1, 1]} : vector<8x128xf32> to vector<8x32xf32>
    %308 = vector.extract_strided_slice %305 {offsets = [0, 32], sizes = [8, 32], strides = [1, 1]} : vector<8x128xf32> to vector<8x32xf32>
    %309 = vector.extract_strided_slice %305 {offsets = [0, 96], sizes = [8, 32], strides = [1, 1]} : vector<8x128xf32> to vector<8x32xf32>
    %310 = vector.extract_strided_slice %306 {offsets = [0, 64], sizes = [8, 32], strides = [1, 1]} : vector<8x128xf32> to vector<8x32xf32>
    %311 = arith.mulf %308, %271 : vector<8x32xf32>
    %312 = arith.mulf %307, %310 : vector<8x32xf32>
    %313 = arith.addf %311, %312 : vector<8x32xf32>
    %314 = math.tanh %313 : vector<8x32xf32>
    %315 = arith.mulf %309, %314 : vector<8x32xf32>
    %316 = vector.extract_strided_slice %13 {offsets = [56, 0], sizes = [8, 128], strides = [1, 1]} : vector<64x128xf32> to vector<8x128xf32>
    %c0_104 = arith.constant 0 : index
    %c0_105 = arith.constant 0 : index
    %317 = vector.load %arg6[%c0_104, %c0_105] : memref<32x128xf32, #tpu.memory_space<vmem>>, vector<32x128xf32>
    %cst_106 = arith.constant dense<0.000000e+00> : vector<8x128xf32>
    %318 = tpu.matmul %292, %317, %cst_106 {dimension_numbers = #tpu.dot_dimension_numbers<[1], [0], [0], [1], [0, 0, 1, 1], [], []>} : vector<8x32xf32>, vector<32x128xf32>, vector<8x128xf32> -> vector<8x128xf32>
    %319 = arith.addf %316, %318 : vector<8x128xf32>
    %320 = arith.negf %319 : vector<8x128xf32>
    %321 = math.exp %320 : vector<8x128xf32>
    %cst_107 = arith.constant 1.000000e+00 : f32
    %322 = vector.broadcast %cst_107 : f32 to vector<8x128xf32>
    %323 = arith.addf %322, %321 : vector<8x128xf32>
    %324 = arith.divf %322, %323 : vector<8x128xf32>
    %325 = math.tanh %319 : vector<8x128xf32>
    %326 = vector.extract_strided_slice %324 {offsets = [0, 0], sizes = [8, 32], strides = [1, 1]} : vector<8x128xf32> to vector<8x32xf32>
    %327 = vector.extract_strided_slice %324 {offsets = [0, 32], sizes = [8, 32], strides = [1, 1]} : vector<8x128xf32> to vector<8x32xf32>
    %328 = vector.extract_strided_slice %324 {offsets = [0, 96], sizes = [8, 32], strides = [1, 1]} : vector<8x128xf32> to vector<8x32xf32>
    %329 = vector.extract_strided_slice %325 {offsets = [0, 64], sizes = [8, 32], strides = [1, 1]} : vector<8x128xf32> to vector<8x32xf32>
    %330 = arith.mulf %327, %290 : vector<8x32xf32>
    %331 = arith.mulf %326, %329 : vector<8x32xf32>
    %332 = arith.addf %330, %331 : vector<8x32xf32>
    %333 = math.tanh %332 : vector<8x32xf32>
    %334 = arith.mulf %328, %333 : vector<8x32xf32>
    %335 = tpu.concatenate %334, %315 in 1 : vector<8x32xf32>, vector<8x32xf32> -> vector<8x64xf32>
    %c0_108 = arith.constant 0 : index
    %c0_109 = arith.constant 0 : index
    %c0_110 = arith.constant 0 : index
    %336 = vector.load %arg7[%c0_108, %c0_109, %c0_110] : memref<1x64x128xf32, #tpu.memory_space<vmem>>, vector<1x64x128xf32>
    %337 = vector.shape_cast %336 : vector<1x64x128xf32> to vector<64x128xf32>
    %cst_111 = arith.constant dense<0.000000e+00> : vector<8x128xf32>
    %338 = tpu.matmul %335, %337, %cst_111 {dimension_numbers = #tpu.dot_dimension_numbers<[1], [0], [0], [1], [0, 0, 1, 1], [], []>} : vector<8x64xf32>, vector<64x128xf32>, vector<8x128xf32> -> vector<8x128xf32>
    %c1_112 = arith.constant 1 : index
    %c0_113 = arith.constant 0 : index
    %c0_114 = arith.constant 0 : index
    %339 = vector.load %arg8[%c1_112, %c0_113, %c0_114] : memref<2x1x128xf32, #tpu.memory_space<vmem>>, vector<1x1x128xf32>
    %340 = vector.shape_cast %339 : vector<1x1x128xf32> to vector<1x128xf32>
    %341 = vector.broadcast %340 : vector<1x128xf32> to vector<8x128xf32>
    %342 = arith.addf %338, %341 : vector<8x128xf32>
    %343 = arith.negf %342 : vector<8x128xf32>
    %344 = math.exp %343 : vector<8x128xf32>
    %cst_115 = arith.constant 1.000000e+00 : f32
    %345 = vector.broadcast %cst_115 : f32 to vector<8x128xf32>
    %346 = arith.addf %345, %344 : vector<8x128xf32>
    %347 = arith.divf %345, %346 : vector<8x128xf32>
    %348 = math.tanh %342 : vector<8x128xf32>
    %349 = vector.extract_strided_slice %347 {offsets = [0, 0], sizes = [8, 32], strides = [1, 1]} : vector<8x128xf32> to vector<8x32xf32>
    %350 = vector.extract_strided_slice %347 {offsets = [0, 32], sizes = [8, 32], strides = [1, 1]} : vector<8x128xf32> to vector<8x32xf32>
    %351 = vector.extract_strided_slice %347 {offsets = [0, 96], sizes = [8, 32], strides = [1, 1]} : vector<8x128xf32> to vector<8x32xf32>
    %352 = vector.extract_strided_slice %348 {offsets = [0, 64], sizes = [8, 32], strides = [1, 1]} : vector<8x128xf32> to vector<8x32xf32>
    %353 = arith.mulf %350, %313 : vector<8x32xf32>
    %354 = arith.mulf %349, %352 : vector<8x32xf32>
    %355 = arith.addf %353, %354 : vector<8x32xf32>
    %356 = math.tanh %355 : vector<8x32xf32>
    %357 = arith.mulf %351, %356 : vector<8x32xf32>
    %c0_116 = arith.constant 0 : index
    %c0_117 = arith.constant 0 : index
    %358 = vector.load %arg9[%c0_116, %c0_117] : memref<32x8xf32, #tpu.memory_space<vmem>>, vector<32x8xf32>
    %cst_118 = arith.constant dense<0.000000e+00> : vector<8x8xf32>
    %359 = tpu.matmul %357, %358, %cst_118 {dimension_numbers = #tpu.dot_dimension_numbers<[1], [0], [0], [1], [0, 0, 1, 1], [], []>} : vector<8x32xf32>, vector<32x8xf32>, vector<8x8xf32> -> vector<8x8xf32>
    %c0_119 = arith.constant 0 : index
    %c0_120 = arith.constant 0 : index
    %360 = vector.load %arg10[%c0_119, %c0_120] : memref<1x8xf32, #tpu.memory_space<vmem>>, vector<1x8xf32>
    %361 = vector.broadcast %360 : vector<1x8xf32> to vector<8x8xf32>
    %362 = arith.addf %359, %361 : vector<8x8xf32>
    %cst_121 = arith.constant dense<0xFF800000> : vector<8xf32>
    %363 = vector.multi_reduction <maximumf>, %362, %cst_121 [1] : vector<8x8xf32> to vector<8xf32>
    %364 = vector.shape_cast %363 : vector<8xf32> to vector<8x1xf32>
    %365 = vector.broadcast %364 : vector<8x1xf32> to vector<8x8xf32>
    %366 = arith.subf %362, %365 : vector<8x8xf32>
    %367 = math.exp %366 : vector<8x8xf32>
    %cst_122 = arith.constant dense<0.000000e+00> : vector<8xf32>
    %368 = vector.multi_reduction <add>, %367, %cst_122 [1] : vector<8x8xf32> to vector<8xf32>
    %369 = vector.shape_cast %368 : vector<8xf32> to vector<8x1xf32>
    %370 = tpu.reciprocal %369 : vector<8x1xf32> -> vector<8x1xf32>
    %371 = vector.broadcast %370 : vector<8x1xf32> to vector<8x8xf32>
    %372 = arith.mulf %367, %371 : vector<8x8xf32>
    %c0_123 = arith.constant 0 : index
    %c0_124 = arith.constant 0 : index
    %373 = vector.load %arg11[%c0_123, %c0_124] : memref<8x8xf32, #tpu.memory_space<vmem>>, vector<8x8xf32>
    tpu.vector_store %arg11[%c0_123, %c0_124], %372 {strides = array<i32>} : memref<8x8xf32, #tpu.memory_space<vmem>>, vector<8x8xf32>,
    %c0_125 = arith.constant 0 : index
    %c0_126 = arith.constant 0 : index
    %c0_127 = arith.constant 0 : index
    %374 = vector.load %arg12[%c0_125, %c0_126, %c0_127] : memref<2x8x32xf32, #tpu.memory_space<vmem>>, vector<1x8x32xf32>
    %375 = vector.shape_cast %374 : vector<1x8x32xf32> to vector<8x32xf32>
    %376 = vector.shape_cast %334 : vector<8x32xf32> to vector<1x8x32xf32>
    tpu.vector_store %arg12[%c0_125, %c0_126, %c0_127], %376 {strides = array<i32>} : memref<2x8x32xf32, #tpu.memory_space<vmem>>, vector<1x8x32xf32>,
    %c0_128 = arith.constant 0 : index
    %c0_129 = arith.constant 0 : index
    %c0_130 = arith.constant 0 : index
    %377 = vector.load %arg13[%c0_128, %c0_129, %c0_130] : memref<2x8x32xf32, #tpu.memory_space<vmem>>, vector<1x8x32xf32>
    %378 = vector.shape_cast %377 : vector<1x8x32xf32> to vector<8x32xf32>
    %379 = vector.shape_cast %332 : vector<8x32xf32> to vector<1x8x32xf32>
    tpu.vector_store %arg13[%c0_128, %c0_129, %c0_130], %379 {strides = array<i32>} : memref<2x8x32xf32, #tpu.memory_space<vmem>>, vector<1x8x32xf32>,
    %c1_131 = arith.constant 1 : index
    %c0_132 = arith.constant 0 : index
    %c0_133 = arith.constant 0 : index
    %380 = vector.load %arg12[%c1_131, %c0_132, %c0_133] : memref<2x8x32xf32, #tpu.memory_space<vmem>>, vector<1x8x32xf32>
    %381 = vector.shape_cast %380 : vector<1x8x32xf32> to vector<8x32xf32>
    %382 = vector.shape_cast %357 : vector<8x32xf32> to vector<1x8x32xf32>
    tpu.vector_store %arg12[%c1_131, %c0_132, %c0_133], %382 {strides = array<i32>} : memref<2x8x32xf32, #tpu.memory_space<vmem>>, vector<1x8x32xf32>,
    %c1_134 = arith.constant 1 : index
    %c0_135 = arith.constant 0 : index
    %c0_136 = arith.constant 0 : index
    %383 = vector.load %arg13[%c1_134, %c0_135, %c0_136] : memref<2x8x32xf32, #tpu.memory_space<vmem>>, vector<1x8x32xf32>
    %384 = vector.shape_cast %383 : vector<1x8x32xf32> to vector<8x32xf32>
    %385 = vector.shape_cast %355 : vector<8x32xf32> to vector<1x8x32xf32>
    tpu.vector_store %arg13[%c1_134, %c0_135, %c0_136], %385 {strides = array<i32>} : memref<2x8x32xf32, #tpu.memory_space<vmem>>, vector<1x8x32xf32>,
    return
  }
  func.func @transform_0(%arg0: i32) -> (i32, i32) {
    %c0_i32 = arith.constant 0 : i32
    %c0_i32_0 = arith.constant 0 : i32
    %c0_i32_1 = arith.constant 0 : i32
    return %c0_i32, %c0_i32_0 : i32, i32
  }
  func.func @transform_1(%arg0: i32) -> (i32, i32) {
    %c0_i32 = arith.constant 0 : i32
    %c0_i32_0 = arith.constant 0 : i32
    %c0_i32_1 = arith.constant 0 : i32
    return %c0_i32, %c0_i32_0 : i32, i32
  }
  func.func @transform_2(%arg0: i32) -> (i32, i32, i32) {
    %c0_i32 = arith.constant 0 : i32
    %c0_i32_0 = arith.constant 0 : i32
    %c0_i32_1 = arith.constant 0 : i32
    %c0_i32_2 = arith.constant 0 : i32
    return %c0_i32, %c0_i32_0, %c0_i32_1 : i32, i32, i32
  }
  func.func @transform_3(%arg0: i32) -> (i32, i32, i32) {
    %c0_i32 = arith.constant 0 : i32
    %c0_i32_0 = arith.constant 0 : i32
    %c0_i32_1 = arith.constant 0 : i32
    %c0_i32_2 = arith.constant 0 : i32
    return %c0_i32, %c0_i32_0, %c0_i32_1 : i32, i32, i32
  }
  func.func @transform_4(%arg0: i32) -> (i32, i32) {
    %c0_i32 = arith.constant 0 : i32
    %c0_i32_0 = arith.constant 0 : i32
    %c0_i32_1 = arith.constant 0 : i32
    return %c0_i32, %c0_i32_0 : i32, i32
  }
  func.func @transform_5(%arg0: i32) -> (i32, i32) {
    %c0_i32 = arith.constant 0 : i32
    %c0_i32_0 = arith.constant 0 : i32
    %c0_i32_1 = arith.constant 0 : i32
    return %c0_i32, %c0_i32_0 : i32, i32
  }
  func.func @transform_6(%arg0: i32) -> (i32, i32, i32) {
    %c0_i32 = arith.constant 0 : i32
    %c0_i32_0 = arith.constant 0 : i32
    %c0_i32_1 = arith.constant 0 : i32
    %c0_i32_2 = arith.constant 0 : i32
    return %c0_i32, %c0_i32_0, %c0_i32_1 : i32, i32, i32
  }
  func.func @transform_7(%arg0: i32) -> (i32, i32, i32) {
    %c0_i32 = arith.constant 0 : i32
    %c0_i32_0 = arith.constant 0 : i32
    %c0_i32_1 = arith.constant 0 : i32
    %c0_i32_2 = arith.constant 0 : i32
    return %c0_i32, %c0_i32_0, %c0_i32_1 : i32, i32, i32
  }
  func.func @transform_8(%arg0: i32) -> (i32, i32) {
    %c0_i32 = arith.constant 0 : i32
    %c0_i32_0 = arith.constant 0 : i32
    %c0_i32_1 = arith.constant 0 : i32
    return %c0_i32, %c0_i32_0 : i32, i32
  }
  func.func @transform_9(%arg0: i32) -> (i32, i32) {
    %c0_i32 = arith.constant 0 : i32
    %c0_i32_0 = arith.constant 0 : i32
    %c0_i32_1 = arith.constant 0 : i32
    return %c0_i32, %c0_i32_0 : i32, i32
  }
  func.func @transform_10(%arg0: i32) -> (i32, i32) {
    %c0_i32 = arith.constant 0 : i32
    %c0_i32_0 = arith.constant 0 : i32
    %c0_i32_1 = arith.constant 0 : i32
    return %c0_i32, %c0_i32_0 : i32, i32
  }
  func.func @transform_11(%arg0: i32) -> (i32, i32, i32) {
    %c0_i32 = arith.constant 0 : i32
    %c0_i32_0 = arith.constant 0 : i32
    %c0_i32_1 = arith.constant 0 : i32
    %c0_i32_2 = arith.constant 0 : i32
    return %c0_i32, %c0_i32_0, %c0_i32_1 : i32, i32, i32
  }
  func.func @transform_12(%arg0: i32) -> (i32, i32, i32) {
    %c0_i32 = arith.constant 0 : i32
    %c0_i32_0 = arith.constant 0 : i32
    %c0_i32_1 = arith.constant 0 : i32
    %c0_i32_2 = arith.constant 0 : i32
    return %c0_i32, %c0_i32_0, %c0_i32_1 : i32, i32, i32
  }
}

</mosaic_0001>

<llo_original>
// kernel: bert_plus_rnn_forward.1
$region0: #{bert_plus_rnn_forward.1}
  #allocation0 [shape = 'u32[]', space=smem, size = 0x4, offset = 0x4, fixed_abs, tag = 'smem constant byte address 0x4 - core index']
  #allocation1 [shape = 'u32[144,128]{1,0:T(1,128)}', space=vmem, size = 0x12000, scoped, tag = 'internal scratch']
  %s0 = inlined_call_operand.vmem [shape: s32[64,1], index: 0, kind: input, shape index: {}]
  %s1 = inlined_call_operand.vmem [shape: f32[64,32], index: 1, kind: input, shape index: {}]
  %s2 = inlined_call_operand.vmem [shape: f32[2,8,32], index: 2, kind: input, shape index: {}]
  %s3 = inlined_call_operand.vmem [shape: f32[2,8,32], index: 3, kind: input, shape index: {}]
  %s4 = inlined_call_operand.vmem [shape: f32[32,128], index: 4, kind: input, shape index: {}]
  %s5 = inlined_call_operand.vmem [shape: f32[32,128], index: 5, kind: input, shape index: {}]
  %s6 = inlined_call_operand.vmem [shape: f32[1,64,128], index: 6, kind: input, shape index: {}]
  %s7 = inlined_call_operand.vmem [shape: f32[2,1,128], index: 7, kind: input, shape index: {}]
  %s8 = inlined_call_operand.vmem [shape: f32[32,8], index: 8, kind: input, shape index: {}]
  %s9 = inlined_call_operand.vmem [shape: f32[1,8], index: 9, kind: input, shape index: {}]
  %s10 = inlined_call_operand.hbm [shape: f32[8,8], index: 10, kind: output, shape index: {0}]
  %s11 = inlined_call_operand.hbm [shape: f32[2,8,32], index: 11, kind: output, shape index: {1}]
  %s12 = inlined_call_operand.hbm [shape: f32[2,8,32], index: 12, kind: output, shape index: {2}]
  %13 = xla_tuple %s10, %s11, %s12
  %s14 = sld [smem:[#allocation0]]
  $region66: #{bert_plus_rnn_forward.1} parent=0
    _
  %s16 = ssub.s32 1, %s14
  %s17 = scalar_select 0, %s16, %s14
  $region1: #{bert_plus_rnn_forward.1} parent=0
    #allocation2 [shape = 'u8[4096]{0}', space=vmem, size = 0x1000, scoped, tag = 'output window, operand 0, single buffered']
    #allocation3 [shape = 's32[1]{0}', space=sflag, size = 0x4, scoped, tag = 'scoped memory for bert_plus_rnn_forward.1']
    #allocation4 [shape = 'u8[8192]{0}', space=vmem, size = 0x2000, scoped, tag = 'output window, operand 1, single buffered']
    #allocation5 [shape = 's32[1]{0}', space=sflag, size = 0x4, scoped, tag = 'scoped memory for bert_plus_rnn_forward.1']
    #allocation6 [shape = 'u8[8192]{0}', space=vmem, size = 0x2000, scoped, tag = 'output window, operand 2, single buffered']
    %18 = vsyncpa [#allocation3], 0
    %19 = vsyncpa [#allocation5], 0
    // Predicated region
    $region2: #{bert_plus_rnn_forward.1} parent=1 // pred_check
      _
    $region3: #{bert_plus_rnn_forward.1} parent=1 // pred_check_branch
      %21 = sbr.rel (0) target = $region5
    $region4: #{bert_plus_rnn_forward.1} parent=1 // pred_region
      _
    $region5: #{bert_plus_rnn_forward.1} parent=1 // pred_fallthru
      _
    // Predicated region
    $region6: #{bert_plus_rnn_forward.1} parent=1 // pred_check
      _
    $region7: #{bert_plus_rnn_forward.1} parent=1 // pred_check_branch
      %23 = sbr.rel (0) target = $region9
    $region8: #{bert_plus_rnn_forward.1} parent=1 // pred_region
      _
    $region9: #{bert_plus_rnn_forward.1} parent=1 // pred_fallthru
      _
    // Predicated region
    $region10: #{bert_plus_rnn_forward.1} parent=1 // pred_check
      _
    $region11: #{bert_plus_rnn_forward.1} parent=1 // pred_check_branch
      %25 = sbr.rel (0) target = $region13
    $region12: #{bert_plus_rnn_forward.1} parent=1 // pred_region
      _
    $region13: #{bert_plus_rnn_forward.1} parent=1 // pred_fallthru
      _
    // Predicated region
    $region14: #{bert_plus_rnn_forward.1} parent=1 // pred_check
      _
    $region15: #{bert_plus_rnn_forward.1} parent=1 // pred_check_branch
      %27 = sbr.rel (0) target = $region17
    $region16: #{bert_plus_rnn_forward.1} parent=1 // pred_region
      _
    $region17: #{bert_plus_rnn_forward.1} parent=1 // pred_fallthru
      _
    // Predicated region
    $region18: #{bert_plus_rnn_forward.1} parent=1 // pred_check
      _
    $region19: #{bert_plus_rnn_forward.1} parent=1 // pred_check_branch
      %29 = sbr.rel (0) target = $region21
    $region20: #{bert_plus_rnn_forward.1} parent=1 // pred_region
      _
    $region21: #{bert_plus_rnn_forward.1} parent=1 // pred_fallthru
      _
    // Predicated region
    $region22: #{bert_plus_rnn_forward.1} parent=1 // pred_check
      _
    $region23: #{bert_plus_rnn_forward.1} parent=1 // pred_check_branch
      %31 = sbr.rel (0) target = $region25
    $region24: #{bert_plus_rnn_forward.1} parent=1 // pred_region
      _
    $region25: #{bert_plus_rnn_forward.1} parent=1 // pred_fallthru
      _
    // Predicated region
    $region26: #{bert_plus_rnn_forward.1} parent=1 // pred_check
      _
    $region27: #{bert_plus_rnn_forward.1} parent=1 // pred_check_branch
      %33 = sbr.rel (0) target = $region29
    $region28: #{bert_plus_rnn_forward.1} parent=1 // pred_region
      _
    $region29: #{bert_plus_rnn_forward.1} parent=1 // pred_fallthru
      _
    // Predicated region
    $region30: #{bert_plus_rnn_forward.1} parent=1 // pred_check
      _
    $region31: #{bert_plus_rnn_forward.1} parent=1 // pred_check_branch
      %35 = sbr.rel (0) target = $region33
    $region32: #{bert_plus_rnn_forward.1} parent=1 // pred_region
      _
    $region33: #{bert_plus_rnn_forward.1} parent=1 // pred_fallthru
      _
    // Predicated region
    $region34: #{bert_plus_rnn_forward.1} parent=1 // pred_check
      _
    $region35: #{bert_plus_rnn_forward.1} parent=1 // pred_check_branch
      %37 = sbr.rel (0) target = $region37
    $region36: #{bert_plus_rnn_forward.1} parent=1 // pred_region
      _
    $region37: #{bert_plus_rnn_forward.1} parent=1 // pred_fallthru
      _
    // Predicated region
    $region38: #{bert_plus_rnn_forward.1} parent=1 // pred_check
      _
    $region39: #{bert_plus_rnn_forward.1} parent=1 // pred_check_branch
      %39 = sbr.rel (0) target = $region41
    $region40: #{bert_plus_rnn_forward.1} parent=1 // pred_region
      _
    $region41: #{bert_plus_rnn_forward.1} parent=1 // pred_fallthru
      _
    %v40 = vld [vmem:[%s0] sm:$0xff]
    %v41 = vld [vmem:[%s0 + $0x8] sm:$0xff]
    %v42 = vld [vmem:[%s0 + $0x10] sm:$0xff]
    %v43 = vld [vmem:[%s0 + $0x18] sm:$0xff]
    %v44 = vld [vmem:[%s0 + $0x20] sm:$0xff]
    %v45 = vld [vmem:[%s0 + $0x28] sm:$0xff]
    %v46 = vld [vmem:[%s0 + $0x30] sm:$0xff]
    %v47 = vld [vmem:[%s0 + $0x38] sm:$0xff]
    %v48 = vlaneseq
    %v49 = vand.u32 %v48, 127
    %50 = vset.pattern.permute.xlu0 0
    %51 = vperm.xlu0 %50, %v40
    %v52 = vpop.permute.xlu0 %51
    %53 = vset.pattern.permute.xlu0 0
    %54 = vperm.xlu0 %53, %v41
    %v55 = vpop.permute.xlu0 %54
    %56 = vset.pattern.permute.xlu0 0
    %57 = vperm.xlu0 %56, %v42
    %v58 = vpop.permute.xlu0 %57
    %59 = vset.pattern.permute.xlu0 0
    %60 = vperm.xlu0 %59, %v43
    %v61 = vpop.permute.xlu0 %60
    %62 = vset.pattern.permute.xlu0 0
    %63 = vperm.xlu0 %62, %v44
    %v64 = vpop.permute.xlu0 %63
    %65 = vset.pattern.permute.xlu0 0
    %66 = vperm.xlu0 %65, %v45
    %v67 = vpop.permute.xlu0 %66
    %68 = vset.pattern.permute.xlu0 0
    %69 = vperm.xlu0 %68, %v46
    %v70 = vpop.permute.xlu0 %69
    %71 = vset.pattern.permute.xlu0 0
    %72 = vperm.xlu0 %71, %v47
    %v73 = vpop.permute.xlu0 %72
    %vm74 = vcmp.eq.s32.totalorder %v52, %v49
    %vm75 = vcmp.eq.s32.totalorder %v55, %v49
    %vm76 = vcmp.eq.s32.totalorder %v58, %v49
    %vm77 = vcmp.eq.s32.totalorder %v61, %v49
    %vm78 = vcmp.eq.s32.totalorder %v64, %v49
    %vm79 = vcmp.eq.s32.totalorder %v67, %v49
    %vm80 = vcmp.eq.s32.totalorder %v70, %v49
    %vm81 = vcmp.eq.s32.totalorder %v73, %v49
    %v82 = vsel %vm74, 1, 0
    %v83 = vsel %vm75, 1, 0
    %v84 = vsel %vm76, 1, 0
    %v85 = vsel %vm77, 1, 0
    %v86 = vsel %vm78, 1, 0
    %v87 = vsel %vm79, 1, 0
    %v88 = vsel %vm80, 1, 0
    %v89 = vsel %vm81, 1, 0
    %v90 = vcvt.s32.f32 %v82
    %v91 = vcvt.s32.f32 %v83
    %v92 = vcvt.s32.f32 %v84
    %v93 = vcvt.s32.f32 %v85
    %v94 = vcvt.s32.f32 %v86
    %v95 = vcvt.s32.f32 %v87
    %v96 = vcvt.s32.f32 %v88
    %v97 = vcvt.s32.f32 %v89
    %v98 = vld [vmem:[%s1] sm:$0xff]
    %v99 = vld [vmem:[%s1 + $0x8] sm:$0xff]
    %v100 = vld [vmem:[%s1 + $0x10] sm:$0xff]
    %v101 = vld [vmem:[%s1 + $0x18] sm:$0xff]
    %v102 = vld [vmem:[%s1 + $0x20] sm:$0xff]
    %v103 = vld [vmem:[%s1 + $0x28] sm:$0xff]
    %v104 = vld [vmem:[%s1 + $0x30] sm:$0xff]
    %v105 = vld [vmem:[%s1 + $0x38] sm:$0xff]
    %vm106 = vcmask 523264
    %v108 = vsel %vm106, %v90, 0
    %v111 = vsel %vm106, %v91, 0
    %v114 = vsel %vm106, %v92, 0
    %v117 = vsel %vm106, %v93, 0
    %v120 = vsel %vm106, %v94, 0
    %v123 = vsel %vm106, %v95, 0
    %v126 = vsel %vm106, %v96, 0
    %v129 = vsel %vm106, %v97, 0
    %131 = vmatprep.subr.mxu0 0.0
    %132 = vmatpush1.msra.mxu0 %v98
    %133 = vmatprep.subr.mxu0 0.0
    %134 = vmatpush1.msra.mxu0 %v99
    %135 = vmatprep.subr.mxu0 0.0
    %136 = vmatpush1.msra.mxu0 %v100
    %137 = vmatprep.subr.mxu0 0.0
    %138 = vmatpush1.msra.mxu0 %v101
    %139 = vmatprep.subr.mxu0 0.0
    %140 = vmatpush1.msra.mxu0 %v102
    %141 = vmatprep.subr.mxu0 0.0
    %142 = vmatpush1.msra.mxu0 %v103
    %143 = vmatprep.subr.mxu0 0.0
    %144 = vmatpush1.msra.mxu0 %v104
    %145 = vmatprep.subr.mxu0 0.0
    %146 = vmatpush1.msra.mxu0 %v105
    %147 = vmatprep.subr.mxu0 0.0
    %148 = vmatpush1.msra.mxu0 0.0
    %149 = vmatprep.subr.mxu0 0.0
    %150 = vmatpush1.msra.mxu0 0.0
    %151 = vmatprep.subr.mxu0 0.0
    %152 = vmatpush1.msra.mxu0 0.0
    %153 = vmatprep.subr.mxu0 0.0
    %154 = vmatpush1.msra.mxu0 0.0
    %155 = vmatprep.subr.mxu0 0.0
    %156 = vmatpush1.msra.mxu0 0.0
    %157 = vmatprep.subr.mxu0 0.0
    %158 = vmatpush1.msra.mxu0 0.0
    %159 = vmatprep.subr.mxu0 0.0
    %160 = vmatpush1.msra.mxu0 0.0
    %161 = vmatprep.subr.mxu0 0.0
    %162 = vmatpush1.msra.mxu0 0.0
    %163 = vmatprep.subr.mxu0 0.0
    %164 = vmatpush1.msra.mxu0 0.0
    %165 = vmatprep.subr.mxu0 0.0
    %166 = vmatpush1.msra.mxu0 0.0
    %167 = vmatprep.subr.mxu0 0.0
    %168 = vmatpush1.msra.mxu0 0.0
    %169 = vmatprep.subr.mxu0 0.0
    %170 = vmatpush1.msra.mxu0 0.0
    %171 = vmatprep.subr.mxu0 0.0
    %172 = vmatpush1.msra.mxu0 0.0
    %173 = vmatprep.subr.mxu0 0.0
    %174 = vmatpush1.msra.mxu0 0.0
    %175 = vmatprep.subr.mxu0 0.0
    %176 = vmatpush1.msra.mxu0 0.0
    %177 = vmatprep.subr.mxu0 0.0
    %178 = vmatpush1.msra.mxu0 0.0
    %179 = vmatprep.subr.mxu0 0.0
    %180 = vmatpush1.msra.mxu0 0.0
    %181 = vmatprep.subr.mxu0 0.0
    %182 = vmatpush1.msra.mxu0 0.0
    %183 = vmatprep.subr.mxu0 0.0
    %184 = vmatpush1.msra.mxu0 0.0
    %185 = vmatprep.subr.mxu0 0.0
    %186 = vmatpush1.msra.mxu0 0.0
    %187 = vmatprep.subr.mxu0 0.0
    %188 = vmatpush1.msra.mxu0 0.0
    %189 = vmatprep.subr.mxu0 0.0
    %190 = vmatpush1.msra.mxu0 0.0
    %191 = vmatprep.subr.mxu0 0.0
    %192 = vmatpush1.msra.mxu0 0.0
    %193 = vmatprep.subr.mxu0 0.0
    %194 = vmatpush1.msra.mxu0 0.0
    %195 = vmatprep.mubr.f32.mxu0 0.0
    %196 = vmatmul.mubr.f32.gmra.mrb[0].mxu0 %v108
    %v197 = vpop.f32.mrb[0].mxu0
    %v198 = vadd.f32 0.0, %v197
    %v199 = vpop.f32.mrb[0].mxu0
    %200 = vmatprep.mubr.f32.mxu0 0.0
    %201 = vmatmul.mubr.f32.gmra.mrb[0].mxu0 %v111
    %v202 = vpop.f32.mrb[0].mxu0
    %v203 = vadd.f32 0.0, %v202
    %v204 = vpop.f32.mrb[0].mxu0
    %205 = vmatprep.mubr.f32.mxu0 0.0
    %206 = vmatmul.mubr.f32.gmra.mrb[0].mxu0 %v114
    %v207 = vpop.f32.mrb[0].mxu0
    %v208 = vadd.f32 0.0, %v207
    %v209 = vpop.f32.mrb[0].mxu0
    %210 = vmatprep.mubr.f32.mxu0 0.0
    %211 = vmatmul.mubr.f32.gmra.mrb[0].mxu0 %v117
    %v212 = vpop.f32.mrb[0].mxu0
    %v213 = vadd.f32 0.0, %v212
    %v214 = vpop.f32.mrb[0].mxu0
    %215 = vmatprep.mubr.f32.mxu0 0.0
    %216 = vmatmul.mubr.f32.gmra.mrb[0].mxu0 %v120
    %v217 = vpop.f32.mrb[0].mxu0
    %v218 = vadd.f32 0.0, %v217
    %v219 = vpop.f32.mrb[0].mxu0
    %220 = vmatprep.mubr.f32.mxu0 0.0
    %221 = vmatmul.mubr.f32.gmra.mrb[0].mxu0 %v123
    %v222 = vpop.f32.mrb[0].mxu0
    %v223 = vadd.f32 0.0, %v222
    %v224 = vpop.f32.mrb[0].mxu0
    %225 = vmatprep.mubr.f32.mxu0 0.0
    %226 = vmatmul.mubr.f32.gmra.mrb[0].mxu0 %v126
    %v227 = vpop.f32.mrb[0].mxu0
    %v228 = vadd.f32 0.0, %v227
    %v229 = vpop.f32.mrb[0].mxu0
    %230 = vmatprep.mubr.f32.mxu0 0.0
    %231 = vmatmul.mubr.f32.gmra.mrb[0].mxu0 %v129
    %v232 = vpop.f32.mrb[0].mxu0
    %v233 = vadd.f32 0.0, %v232
    %v234 = vpop.f32.mrb[0].mxu0
    %235 = vdwg.mxu0
    %v236 = vld [vmem:[%s4] sm:$0xff]
    %v237 = vld [vmem:[%s4 + $0x8] sm:$0xff]
    %v238 = vld [vmem:[%s4 + $0x10] sm:$0xff]
    %v239 = vld [vmem:[%s4 + $0x18] sm:$0xff]
    %v240 = vld [vmem:[%s7] sm:$0x1]
    %v242 = vlaneseq
    %v243 = vshrl.u32 %v242, 7
    %v244 = vsub.s32 0, %v243
    %v245 = vrot.slane %v240, %v244
    %vm247 = vcmask 261120
    %v249 = vsel %vm247, %v198, 0
    %v252 = vsel %vm247, %v203, 0
    %v255 = vsel %vm247, %v208, 0
    %v258 = vsel %vm247, %v213, 0
    %v261 = vsel %vm247, %v218, 0
    %v264 = vsel %vm247, %v223, 0
    %v267 = vsel %vm247, %v228, 0
    %v270 = vsel %vm247, %v233, 0
    %272 = vmatprep.subr.mxu0 0.0
    %273 = vmatpush1.msra.mxu0 %v236
    %274 = vmatprep.subr.mxu0 0.0
    %275 = vmatpush1.msra.mxu0 %v237
    %276 = vmatprep.subr.mxu0 0.0
    %277 = vmatpush1.msra.mxu0 %v238
    %278 = vmatprep.subr.mxu0 0.0
    %279 = vmatpush1.msra.mxu0 %v239
    %280 = vmatprep.subr.mxu0 0.0
    %281 = vmatpush1.msra.mxu0 0.0
    %282 = vmatprep.subr.mxu0 0.0
    %283 = vmatpush1.msra.mxu0 0.0
    %284 = vmatprep.subr.mxu0 0.0
    %285 = vmatpush1.msra.mxu0 0.0
    %286 = vmatprep.subr.mxu0 0.0
    %287 = vmatpush1.msra.mxu0 0.0
    %288 = vmatprep.subr.mxu0 0.0
    %289 = vmatpush1.msra.mxu0 0.0
    %290 = vmatprep.subr.mxu0 0.0
    %291 = vmatpush1.msra.mxu0 0.0
    %292 = vmatprep.subr.mxu0 0.0
    %293 = vmatpush1.msra.mxu0 0.0
    %294 = vmatprep.subr.mxu0 0.0
    %295 = vmatpush1.msra.mxu0 0.0
    %296 = vmatprep.subr.mxu0 0.0
    %297 = vmatpush1.msra.mxu0 0.0
    %298 = vmatprep.subr.mxu0 0.0
    %299 = vmatpush1.msra.mxu0 0.0
    %300 = vmatprep.subr.mxu0 0.0
    %301 = vmatpush1.msra.mxu0 0.0
    %302 = vmatprep.subr.mxu0 0.0
    %303 = vmatpush1.msra.mxu0 0.0
    %304 = vmatprep.subr.mxu0 0.0
    %305 = vmatpush1.msra.mxu0 0.0
    %306 = vmatprep.subr.mxu0 0.0
    %307 = vmatpush1.msra.mxu0 0.0
    %308 = vmatprep.subr.mxu0 0.0
    %309 = vmatpush1.msra.mxu0 0.0
    %310 = vmatprep.subr.mxu0 0.0
    %311 = vmatpush1.msra.mxu0 0.0
    %312 = vmatprep.subr.mxu0 0.0
    %313 = vmatpush1.msra.mxu0 0.0
    %314 = vmatprep.subr.mxu0 0.0
    %315 = vmatpush1.msra.mxu0 0.0
    %316 = vmatprep.subr.mxu0 0.0
    %317 = vmatpush1.msra.mxu0 0.0
    %318 = vmatprep.subr.mxu0 0.0
    %319 = vmatpush1.msra.mxu0 0.0
    %320 = vmatprep.subr.mxu0 0.0
    %321 = vmatpush1.msra.mxu0 0.0
    %322 = vmatprep.subr.mxu0 0.0
    %323 = vmatpush1.msra.mxu0 0.0
    %324 = vmatprep.subr.mxu0 0.0
    %325 = vmatpush1.msra.mxu0 0.0
    %326 = vmatprep.subr.mxu0 0.0
    %327 = vmatpush1.msra.mxu0 0.0
    %328 = vmatprep.subr.mxu0 0.0
    %329 = vmatpush1.msra.mxu0 0.0
    %330 = vmatprep.subr.mxu0 0.0
    %331 = vmatpush1.msra.mxu0 0.0
    %332 = vmatprep.subr.mxu0 0.0
    %333 = vmatpush1.msra.mxu0 0.0
    %334 = vmatprep.subr.mxu0 0.0
    %335 = vmatpush1.msra.mxu0 0.0
    %336 = vmatprep.mubr.f32.mxu0 0.0
    %337 = vmatmul.mubr.f32.gmra.mrb[0].mxu0 %v249
    %v338 = vpop.f32.mrb[0].mxu0
    %v339 = vadd.f32 %v245, %v338
    %v340 = vpop.f32.mrb[0].mxu0
    %341 = vmatprep.mubr.f32.mxu0 0.0
    %342 = vmatmul.mubr.f32.gmra.mrb[0].mxu0 %v252
    %v343 = vpop.f32.mrb[0].mxu0
    %v344 = vadd.f32 %v245, %v343
    %v345 = vpop.f32.mrb[0].mxu0
    %346 = vmatprep.mubr.f32.mxu0 0.0
    %347 = vmatmul.mubr.f32.gmra.mrb[0].mxu0 %v255
    %v348 = vpop.f32.mrb[0].mxu0
    %v349 = vadd.f32 %v245, %v348
    %v350 = vpop.f32.mrb[0].mxu0
    %351 = vmatprep.mubr.f32.mxu0 0.0
    %352 = vmatmul.mubr.f32.gmra.mrb[0].mxu0 %v258
    %v353 = vpop.f32.mrb[0].mxu0
    %v354 = vadd.f32 %v245, %v353
    %v355 = vpop.f32.mrb[0].mxu0
    %356 = vmatprep.mubr.f32.mxu0 0.0
    %357 = vmatmul.mubr.f32.gmra.mrb[0].mxu0 %v261
    %v358 = vpop.f32.mrb[0].mxu0
    %v359 = vadd.f32 %v245, %v358
    %v360 = vpop.f32.mrb[0].mxu0
    %361 = vmatprep.mubr.f32.mxu0 0.0
    %362 = vmatmul.mubr.f32.gmra.mrb[0].mxu0 %v264
    %v363 = vpop.f32.mrb[0].mxu0
    %v364 = vadd.f32 %v245, %v363
    %v365 = vpop.f32.mrb[0].mxu0
    %366 = vmatprep.mubr.f32.mxu0 0.0
    %367 = vmatmul.mubr.f32.gmra.mrb[0].mxu0 %v267
    %v368 = vpop.f32.mrb[0].mxu0
    %v369 = vadd.f32 %v245, %v368
    %v370 = vpop.f32.mrb[0].mxu0
    %371 = vmatprep.mubr.f32.mxu0 0.0
    %372 = vmatmul.mubr.f32.gmra.mrb[0].mxu0 %v270
    %v373 = vpop.f32.mrb[0].mxu0
    %v374 = vadd.f32 %v245, %v373
    %v375 = vpop.f32.mrb[0].mxu0
    %376 = vdwg.mxu0
    %v377 = vld [vmem:[%s2] sm:$0xff]
    %s378 = scalar_lea.vmem %s2, 8
    %v379 = vld [vmem:[%s378] sm:$0xff]
    %v380 = vld [vmem:[%s3] sm:$0xff]
    %s381 = scalar_lea.vmem %s3, 8
    %v382 = vld [vmem:[%s381] sm:$0xff]
    %v383 = vld [vmem:[%s5] sm:$0xff]
    %v384 = vld [vmem:[%s5 + $0x8] sm:$0xff]
    %v385 = vld [vmem:[%s5 + $0x10] sm:$0xff]
    %v386 = vld [vmem:[%s5 + $0x18] sm:$0xff]
    %v388 = vsel %vm247, %v377, 0
    %390 = vmatprep.subr.mxu0 0.0
    %391 = vmatpush1.msra.mxu0 %v383
    %392 = vmatprep.subr.mxu0 0.0
    %393 = vmatpush1.msra.mxu0 %v384
    %394 = vmatprep.subr.mxu0 0.0
    %395 = vmatpush1.msra.mxu0 %v385
    %396 = vmatprep.subr.mxu0 0.0
    %397 = vmatpush1.msra.mxu0 %v386
    %398 = vmatprep.subr.mxu0 0.0
    %399 = vmatpush1.msra.mxu0 0.0
    %400 = vmatprep.subr.mxu0 0.0
    %401 = vmatpush1.msra.mxu0 0.0
    %402 = vmatprep.subr.mxu0 0.0
    %403 = vmatpush1.msra.mxu0 0.0
    %404 = vmatprep.subr.mxu0 0.0
    %405 = vmatpush1.msra.mxu0 0.0
    %406 = vmatprep.subr.mxu0 0.0
    %407 = vmatpush1.msra.mxu0 0.0
    %408 = vmatprep.subr.mxu0 0.0
    %409 = vmatpush1.msra.mxu0 0.0
    %410 = vmatprep.subr.mxu0 0.0
    %411 = vmatpush1.msra.mxu0 0.0
    %412 = vmatprep.subr.mxu0 0.0
    %413 = vmatpush1.msra.mxu0 0.0
    %414 = vmatprep.subr.mxu0 0.0
    %415 = vmatpush1.msra.mxu0 0.0
    %416 = vmatprep.subr.mxu0 0.0
    %417 = vmatpush1.msra.mxu0 0.0
    %418 = vmatprep.subr.mxu0 0.0
    %419 = vmatpush1.msra.mxu0 0.0
    %420 = vmatprep.subr.mxu0 0.0
    %421 = vmatpush1.msra.mxu0 0.0
    %422 = vmatprep.subr.mxu0 0.0
    %423 = vmatpush1.msra.mxu0 0.0
    %424 = vmatprep.subr.mxu0 0.0
    %425 = vmatpush1.msra.mxu0 0.0
    %426 = vmatprep.subr.mxu0 0.0
    %427 = vmatpush1.msra.mxu0 0.0
    %428 = vmatprep.subr.mxu0 0.0
    %429 = vmatpush1.msra.mxu0 0.0
    %430 = vmatprep.subr.mxu0 0.0
    %431 = vmatpush1.msra.mxu0 0.0
    %432 = vmatprep.subr.mxu0 0.0
    %433 = vmatpush1.msra.mxu0 0.0
    %434 = vmatprep.subr.mxu0 0.0
    %435 = vmatpush1.msra.mxu0 0.0
    %436 = vmatprep.subr.mxu0 0.0
    %437 = vmatpush1.msra.mxu0 0.0
    %438 = vmatprep.subr.mxu0 0.0
    %439 = vmatpush1.msra.mxu0 0.0
    %440 = vmatprep.subr.mxu0 0.0
    %441 = vmatpush1.msra.mxu0 0.0
    %442 = vmatprep.subr.mxu0 0.0
    %443 = vmatpush1.msra.mxu0 0.0
    %444 = vmatprep.subr.mxu0 0.0
    %445 = vmatpush1.msra.mxu0 0.0
    %446 = vmatprep.subr.mxu0 0.0
    %447 = vmatpush1.msra.mxu0 0.0
    %448 = vmatprep.subr.mxu0 0.0
    %449 = vmatpush1.msra.mxu0 0.0
    %450 = vmatprep.subr.mxu0 0.0
    %451 = vmatpush1.msra.mxu0 0.0
    %452 = vmatprep.subr.mxu0 0.0
    %453 = vmatpush1.msra.mxu0 0.0
    %454 = vmatprep.mubr.f32.mxu0 0.0
    %455 = vmatmul.mubr.f32.gmra.mrb[0].mxu0 %v388
    %v456 = vpop.f32.mrb[0].mxu0
    %v457 = vadd.f32 0.0, %v456
    %v458 = vpop.f32.mrb[0].mxu0
    %459 = vdwg.mxu0
    %v460 = vadd.f32 %v339, %v457
    %v461 = vxor.u32 %v460, 2147483648
    %v462 = vmul.f32 %v461, 1.442695
    %v463 = vpow.pop %v462
    %v464 = vadd.f32 %v463, 1.0
    %v465 = vrcp.pop %v464
    %v466 = vmul.f32 1.0, %v465
    %v467 = vtanh.pop %v460
    %469 = vrot.lane.b32.xlu0 %v380, 32
    %v470 = vpop.permute.xlu0 %469
    %v472 = vmul.f32 %v466, %v470
    %474 = vrot.lane.b32.xlu0 %v467, 64
    %v475 = vpop.permute.xlu0 %474
    %v477 = vmul.f32 %v466, %v475
    %479 = vrot.lane.b32.xlu0 %v477, 32
    %v480 = vpop.permute.xlu0 %479
    %v482 = vadd.f32 %v472, %v480
    %v483 = vtanh.pop %v482
    %485 = vrot.lane.b32.xlu0 %v483, 64
    %v486 = vpop.permute.xlu0 %485
    %v488 = vmul.f32 %v466, %v486
    %490 = vrot.lane.b32.xlu0 %v488, 32
    %v491 = vpop.permute.xlu0 %490
    %494 = vrot.lane.b32.xlu0 %v379, 32
    %v495 = vpop.permute.xlu0 %494
    %v497 = vsel %vm247, %v491, %v495
    %v498 = vld [vmem:[%s6] sm:$0xff]
    %v499 = vld [vmem:[%s6 + $0x8] sm:$0xff]
    %v500 = vld [vmem:[%s6 + $0x10] sm:$0xff]
    %v501 = vld [vmem:[%s6 + $0x18] sm:$0xff]
    %v502 = vld [vmem:[%s6 + $0x20] sm:$0xff]
    %v503 = vld [vmem:[%s6 + $0x28] sm:$0xff]
    %v504 = vld [vmem:[%s6 + $0x30] sm:$0xff]
    %v505 = vld [vmem:[%s6 + $0x38] sm:$0xff]
    %s506 = scalar_lea.vmem %s7, 1
    %v507 = vld [vmem:[%s506] sm:$0x1]
    %v509 = vlaneseq
    %v510 = vshrl.u32 %v509, 7
    %v511 = vsub.s32 0, %v510
    %v512 = vrot.slane %v507, %v511
    %v515 = vsel %vm106, %v497, 0
    %517 = vmatprep.subr.mxu0 0.0
    %518 = vmatpush1.msra.mxu0 %v498
    %519 = vmatprep.subr.mxu0 0.0
    %520 = vmatpush1.msra.mxu0 %v499
    %521 = vmatprep.subr.mxu0 0.0
    %522 = vmatpush1.msra.mxu0 %v500
    %523 = vmatprep.subr.mxu0 0.0
    %524 = vmatpush1.msra.mxu0 %v501
    %525 = vmatprep.subr.mxu0 0.0
    %526 = vmatpush1.msra.mxu0 %v502
    %527 = vmatprep.subr.mxu0 0.0
    %528 = vmatpush1.msra.mxu0 %v503
    %529 = vmatprep.subr.mxu0 0.0
    %530 = vmatpush1.msra.mxu0 %v504
    %531 = vmatprep.subr.mxu0 0.0
    %532 = vmatpush1.msra.mxu0 %v505
    %533 = vmatprep.subr.mxu0 0.0
    %534 = vmatpush1.msra.mxu0 0.0
    %535 = vmatprep.subr.mxu0 0.0
    %536 = vmatpush1.msra.mxu0 0.0
    %537 = vmatprep.subr.mxu0 0.0
    %538 = vmatpush1.msra.mxu0 0.0
    %539 = vmatprep.subr.mxu0 0.0
    %540 = vmatpush1.msra.mxu0 0.0
    %541 = vmatprep.subr.mxu0 0.0
    %542 = vmatpush1.msra.mxu0 0.0
    %543 = vmatprep.subr.mxu0 0.0
    %544 = vmatpush1.msra.mxu0 0.0
    %545 = vmatprep.subr.mxu0 0.0
    %546 = vmatpush1.msra.mxu0 0.0
    %547 = vmatprep.subr.mxu0 0.0
    %548 = vmatpush1.msra.mxu0 0.0
    %549 = vmatprep.subr.mxu0 0.0
    %550 = vmatpush1.msra.mxu0 0.0
    %551 = vmatprep.subr.mxu0 0.0
    %552 = vmatpush1.msra.mxu0 0.0
    %553 = vmatprep.subr.mxu0 0.0
    %554 = vmatpush1.msra.mxu0 0.0
    %555 = vmatprep.subr.mxu0 0.0
    %556 = vmatpush1.msra.mxu0 0.0
    %557 = vmatprep.subr.mxu0 0.0
    %558 = vmatpush1.msra.mxu0 0.0
    %559 = vmatprep.subr.mxu0 0.0
    %560 = vmatpush1.msra.mxu0 0.0
    %561 = vmatprep.subr.mxu0 0.0
    %562 = vmatpush1.msra.mxu0 0.0
    %563 = vmatprep.subr.mxu0 0.0
    %564 = vmatpush1.msra.mxu0 0.0
    %565 = vmatprep.subr.mxu0 0.0
    %566 = vmatpush1.msra.mxu0 0.0
    %567 = vmatprep.subr.mxu0 0.0
    %568 = vmatpush1.msra.mxu0 0.0
    %569 = vmatprep.subr.mxu0 0.0
    %570 = vmatpush1.msra.mxu0 0.0
    %571 = vmatprep.subr.mxu0 0.0
    %572 = vmatpush1.msra.mxu0 0.0
    %573 = vmatprep.subr.mxu0 0.0
    %574 = vmatpush1.msra.mxu0 0.0
    %575 = vmatprep.subr.mxu0 0.0
    %576 = vmatpush1.msra.mxu0 0.0
    %577 = vmatprep.subr.mxu0 0.0
    %578 = vmatpush1.msra.mxu0 0.0
    %579 = vmatprep.subr.mxu0 0.0
    %580 = vmatpush1.msra.mxu0 0.0
    %581 = vmatprep.mubr.f32.mxu0 0.0
    %582 = vmatmul.mubr.f32.gmra.mrb[0].mxu0 %v515
    %v583 = vpop.f32.mrb[0].mxu0
    %v584 = vadd.f32 %v512, %v583
    %v585 = vpop.f32.mrb[0].mxu0
    %586 = vdwg.mxu0
    %v587 = vxor.u32 %v584, 2147483648
    %v588 = vmul.f32 %v587, 1.442695
    %v589 = vpow.pop %v588
    %v590 = vadd.f32 %v589, 1.0
    %v591 = vrcp.pop %v590
    %v592 = vmul.f32 1.0, %v591
    %v593 = vtanh.pop %v584
    %595 = vrot.lane.b32.xlu0 %v382, 32
    %v596 = vpop.permute.xlu0 %595
    %v598 = vmul.f32 %v592, %v596
    %600 = vrot.lane.b32.xlu0 %v593, 64
    %v601 = vpop.permute.xlu0 %600
    %v603 = vmul.f32 %v592, %v601
    %605 = vrot.lane.b32.xlu0 %v603, 32
    %v606 = vpop.permute.xlu0 %605
    %v608 = vadd.f32 %v598, %v606
    %v609 = vtanh.pop %v608
    %611 = vrot.lane.b32.xlu0 %v609, 64
    %v612 = vpop.permute.xlu0 %611
    %v614 = vmul.f32 %v592, %v612
    %v615 = vsel %vm247, %v491, 0
    %617 = vmatprep.subr.mxu0 0.0
    %618 = vmatpush1.msra.mxu0 %v383
    %619 = vmatprep.subr.mxu0 0.0
    %620 = vmatpush1.msra.mxu0 %v384
    %621 = vmatprep.subr.mxu0 0.0
    %622 = vmatpush1.msra.mxu0 %v385
    %623 = vmatprep.subr.mxu0 0.0
    %624 = vmatpush1.msra.mxu0 %v386
    %625 = vmatprep.subr.mxu0 0.0
    %626 = vmatpush1.msra.mxu0 0.0
    %627 = vmatprep.subr.mxu0 0.0
    %628 = vmatpush1.msra.mxu0 0.0
    %629 = vmatprep.subr.mxu0 0.0
    %630 = vmatpush1.msra.mxu0 0.0
    %631 = vmatprep.subr.mxu0 0.0
    %632 = vmatpush1.msra.mxu0 0.0
    %633 = vmatprep.subr.mxu0 0.0
    %634 = vmatpush1.msra.mxu0 0.0
    %635 = vmatprep.subr.mxu0 0.0
    %636 = vmatpush1.msra.mxu0 0.0
    %637 = vmatprep.subr.mxu0 0.0
    %638 = vmatpush1.msra.mxu0 0.0
    %639 = vmatprep.subr.mxu0 0.0
    %640 = vmatpush1.msra.mxu0 0.0
    %641 = vmatprep.subr.mxu0 0.0
    %642 = vmatpush1.msra.mxu0 0.0
    %643 = vmatprep.subr.mxu0 0.0
    %644 = vmatpush1.msra.mxu0 0.0
    %645 = vmatprep.subr.mxu0 0.0
    %646 = vmatpush1.msra.mxu0 0.0
    %647 = vmatprep.subr.mxu0 0.0
    %648 = vmatpush1.msra.mxu0 0.0
    %649 = vmatprep.subr.mxu0 0.0
    %650 = vmatpush1.msra.mxu0 0.0
    %651 = vmatprep.subr.mxu0 0.0
    %652 = vmatpush1.msra.mxu0 0.0
    %653 = vmatprep.subr.mxu0 0.0
    %654 = vmatpush1.msra.mxu0 0.0
    %655 = vmatprep.subr.mxu0 0.0
    %656 = vmatpush1.msra.mxu0 0.0
    %657 = vmatprep.subr.mxu0 0.0
    %658 = vmatpush1.msra.mxu0 0.0
    %659 = vmatprep.subr.mxu0 0.0
    %660 = vmatpush1.msra.mxu0 0.0
    %661 = vmatprep.subr.mxu0 0.0
    %662 = vmatpush1.msra.mxu0 0.0
    %663 = vmatprep.subr.mxu0 0.0
    %664 = vmatpush1.msra.mxu0 0.0
    %665 = vmatprep.subr.mxu0 0.0
    %666 = vmatpush1.msra.mxu0 0.0
    %667 = vmatprep.subr.mxu0 0.0
    %668 = vmatpush1.msra.mxu0 0.0
    %669 = vmatprep.subr.mxu0 0.0
    %670 = vmatpush1.msra.mxu0 0.0
    %671 = vmatprep.subr.mxu0 0.0
    %672 = vmatpush1.msra.mxu0 0.0
    %673 = vmatprep.subr.mxu0 0.0
    %674 = vmatpush1.msra.mxu0 0.0
    %675 = vmatprep.subr.mxu0 0.0
    %676 = vmatpush1.msra.mxu0 0.0
    %677 = vmatprep.subr.mxu0 0.0
    %678 = vmatpush1.msra.mxu0 0.0
    %679 = vmatprep.subr.mxu0 0.0
    %680 = vmatpush1.msra.mxu0 0.0
    %681 = vmatprep.mubr.f32.mxu0 0.0
    %682 = vmatmul.mubr.f32.gmra.mrb[0].mxu0 %v615
    %v683 = vpop.f32.mrb[0].mxu0
    %v684 = vadd.f32 0.0, %v683
    %v685 = vpop.f32.mrb[0].mxu0
    %686 = vdwg.mxu0
    %v687 = vadd.f32 %v344, %v684
    %v688 = vxor.u32 %v687, 2147483648
    %v689 = vmul.f32 %v688, 1.442695
    %v690 = vpow.pop %v689
    %v691 = vadd.f32 %v690, 1.0
    %v692 = vrcp.pop %v691
    %v693 = vmul.f32 1.0, %v692
    %v694 = vtanh.pop %v687
    %v695 = vmul.f32 %v693, %v482
    %697 = vrot.lane.b32.xlu0 %v694, 64
    %v698 = vpop.permute.xlu0 %697
    %v700 = vmul.f32 %v693, %v698
    %702 = vrot.lane.b32.xlu0 %v700, 32
    %v703 = vpop.permute.xlu0 %702
    %v705 = vadd.f32 %v695, %v703
    %v706 = vtanh.pop %v705
    %708 = vrot.lane.b32.xlu0 %v706, 64
    %v709 = vpop.permute.xlu0 %708
    %v711 = vmul.f32 %v693, %v709
    %713 = vrot.lane.b32.xlu0 %v711, 32
    %v714 = vpop.permute.xlu0 %713
    %717 = vrot.lane.b32.xlu0 %v614, 64
    %v718 = vpop.permute.xlu0 %717
    %v720 = vsel %vm247, %v714, %v718
    %v722 = vsel %vm106, %v720, 0
    %724 = vmatprep.subr.mxu0 0.0
    %725 = vmatpush1.msra.mxu0 %v498
    %726 = vmatprep.subr.mxu0 0.0
    %727 = vmatpush1.msra.mxu0 %v499
    %728 = vmatprep.subr.mxu0 0.0
    %729 = vmatpush1.msra.mxu0 %v500
    %730 = vmatprep.subr.mxu0 0.0
    %731 = vmatpush1.msra.mxu0 %v501
    %732 = vmatprep.subr.mxu0 0.0
    %733 = vmatpush1.msra.mxu0 %v502
    %734 = vmatprep.subr.mxu0 0.0
    %735 = vmatpush1.msra.mxu0 %v503
    %736 = vmatprep.subr.mxu0 0.0
    %737 = vmatpush1.msra.mxu0 %v504
    %738 = vmatprep.subr.mxu0 0.0
    %739 = vmatpush1.msra.mxu0 %v505
    %740 = vmatprep.subr.mxu0 0.0
    %741 = vmatpush1.msra.mxu0 0.0
    %742 = vmatprep.subr.mxu0 0.0
    %743 = vmatpush1.msra.mxu0 0.0
    %744 = vmatprep.subr.mxu0 0.0
    %745 = vmatpush1.msra.mxu0 0.0
    %746 = vmatprep.subr.mxu0 0.0
    %747 = vmatpush1.msra.mxu0 0.0
    %748 = vmatprep.subr.mxu0 0.0
    %749 = vmatpush1.msra.mxu0 0.0
    %750 = vmatprep.subr.mxu0 0.0
    %751 = vmatpush1.msra.mxu0 0.0
    %752 = vmatprep.subr.mxu0 0.0
    %753 = vmatpush1.msra.mxu0 0.0
    %754 = vmatprep.subr.mxu0 0.0
    %755 = vmatpush1.msra.mxu0 0.0
    %756 = vmatprep.subr.mxu0 0.0
    %757 = vmatpush1.msra.mxu0 0.0
    %758 = vmatprep.subr.mxu0 0.0
    %759 = vmatpush1.msra.mxu0 0.0
    %760 = vmatprep.subr.mxu0 0.0
    %761 = vmatpush1.msra.mxu0 0.0
    %762 = vmatprep.subr.mxu0 0.0
    %763 = vmatpush1.msra.mxu0 0.0
    %764 = vmatprep.subr.mxu0 0.0
    %765 = vmatpush1.msra.mxu0 0.0
    %766 = vmatprep.subr.mxu0 0.0
    %767 = vmatpush1.msra.mxu0 0.0
    %768 = vmatprep.subr.mxu0 0.0
    %769 = vmatpush1.msra.mxu0 0.0
    %770 = vmatprep.subr.mxu0 0.0
    %771 = vmatpush1.msra.mxu0 0.0
    %772 = vmatprep.subr.mxu0 0.0
    %773 = vmatpush1.msra.mxu0 0.0
    %774 = vmatprep.subr.mxu0 0.0
    %775 = vmatpush1.msra.mxu0 0.0
    %776 = vmatprep.subr.mxu0 0.0
    %777 = vmatpush1.msra.mxu0 0.0
    %778 = vmatprep.subr.mxu0 0.0
    %779 = vmatpush1.msra.mxu0 0.0
    %780 = vmatprep.subr.mxu0 0.0
    %781 = vmatpush1.msra.mxu0 0.0
    %782 = vmatprep.subr.mxu0 0.0
    %783 = vmatpush1.msra.mxu0 0.0
    %784 = vmatprep.subr.mxu0 0.0
    %785 = vmatpush1.msra.mxu0 0.0
    %786 = vmatprep.subr.mxu0 0.0
    %787 = vmatpush1.msra.mxu0 0.0
    %788 = vmatprep.mubr.f32.mxu0 0.0
    %789 = vmatmul.mubr.f32.gmra.mrb[0].mxu0 %v722
    %v790 = vpop.f32.mrb[0].mxu0
    %v791 = vadd.f32 %v512, %v790
    %v792 = vpop.f32.mrb[0].mxu0
    %793 = vdwg.mxu0
    %v794 = vxor.u32 %v791, 2147483648
    %v795 = vmul.f32 %v794, 1.442695
    %v796 = vpow.pop %v795
    %v797 = vadd.f32 %v796, 1.0
    %v798 = vrcp.pop %v797
    %v799 = vmul.f32 1.0, %v798
    %v800 = vtanh.pop %v791
    %v801 = vmul.f32 %v799, %v608
    %803 = vrot.lane.b32.xlu0 %v800, 64
    %v804 = vpop.permute.xlu0 %803
    %v806 = vmul.f32 %v799, %v804
    %808 = vrot.lane.b32.xlu0 %v806, 32
    %v809 = vpop.permute.xlu0 %808
    %v811 = vadd.f32 %v801, %v809
    %v812 = vtanh.pop %v811
    %814 = vrot.lane.b32.xlu0 %v812, 64
    %v815 = vpop.permute.xlu0 %814
    %v817 = vmul.f32 %v799, %v815
    %v818 = vsel %vm247, %v714, 0
    %820 = vmatprep.subr.mxu0 0.0
    %821 = vmatpush1.msra.mxu0 %v383
    %822 = vmatprep.subr.mxu0 0.0
    %823 = vmatpush1.msra.mxu0 %v384
    %824 = vmatprep.subr.mxu0 0.0
    %825 = vmatpush1.msra.mxu0 %v385
    %826 = vmatprep.subr.mxu0 0.0
    %827 = vmatpush1.msra.mxu0 %v386
    %828 = vmatprep.subr.mxu0 0.0
    %829 = vmatpush1.msra.mxu0 0.0
    %830 = vmatprep.subr.mxu0 0.0
    %831 = vmatpush1.msra.mxu0 0.0
    %832 = vmatprep.subr.mxu0 0.0
    %833 = vmatpush1.msra.mxu0 0.0
    %834 = vmatprep.subr.mxu0 0.0
    %835 = vmatpush1.msra.mxu0 0.0
    %836 = vmatprep.subr.mxu0 0.0
    %837 = vmatpush1.msra.mxu0 0.0
    %838 = vmatprep.subr.mxu0 0.0
    %839 = vmatpush1.msra.mxu0 0.0
    %840 = vmatprep.subr.mxu0 0.0
    %841 = vmatpush1.msra.mxu0 0.0
    %842 = vmatprep.subr.mxu0 0.0
    %843 = vmatpush1.msra.mxu0 0.0
    %844 = vmatprep.subr.mxu0 0.0
    %845 = vmatpush1.msra.mxu0 0.0
    %846 = vmatprep.subr.mxu0 0.0
    %847 = vmatpush1.msra.mxu0 0.0
    %848 = vmatprep.subr.mxu0 0.0
    %849 = vmatpush1.msra.mxu0 0.0
    %850 = vmatprep.subr.mxu0 0.0
    %851 = vmatpush1.msra.mxu0 0.0
    %852 = vmatprep.subr.mxu0 0.0
    %853 = vmatpush1.msra.mxu0 0.0
    %854 = vmatprep.subr.mxu0 0.0
    %855 = vmatpush1.msra.mxu0 0.0
    %856 = vmatprep.subr.mxu0 0.0
    %857 = vmatpush1.msra.mxu0 0.0
    %858 = vmatprep.subr.mxu0 0.0
    %859 = vmatpush1.msra.mxu0 0.0
    %860 = vmatprep.subr.mxu0 0.0
    %861 = vmatpush1.msra.mxu0 0.0
    %862 = vmatprep.subr.mxu0 0.0
    %863 = vmatpush1.msra.mxu0 0.0
    %864 = vmatprep.subr.mxu0 0.0
    %865 = vmatpush1.msra.mxu0 0.0
    %866 = vmatprep.subr.mxu0 0.0
    %867 = vmatpush1.msra.mxu0 0.0
    %868 = vmatprep.subr.mxu0 0.0
    %869 = vmatpush1.msra.mxu0 0.0
    %870 = vmatprep.subr.mxu0 0.0
    %871 = vmatpush1.msra.mxu0 0.0
    %872 = vmatprep.subr.mxu0 0.0
    %873 = vmatpush1.msra.mxu0 0.0
    %874 = vmatprep.subr.mxu0 0.0
    %875 = vmatpush1.msra.mxu0 0.0
    %876 = vmatprep.subr.mxu0 0.0
    %877 = vmatpush1.msra.mxu0 0.0
    %878 = vmatprep.subr.mxu0 0.0
    %879 = vmatpush1.msra.mxu0 0.0
    %880 = vmatprep.subr.mxu0 0.0
    %881 = vmatpush1.msra.mxu0 0.0
    %882 = vmatprep.subr.mxu0 0.0
    %883 = vmatpush1.msra.mxu0 0.0
    %884 = vmatprep.mubr.f32.mxu0 0.0
    %885 = vmatmul.mubr.f32.gmra.mrb[0].mxu0 %v818
    %v886 = vpop.f32.mrb[0].mxu0
    %v887 = vadd.f32 0.0, %v886
    %v888 = vpop.f32.mrb[0].mxu0
    %889 = vdwg.mxu0
    %v890 = vadd.f32 %v349, %v887
    %v891 = vxor.u32 %v890, 2147483648
    %v892 = vmul.f32 %v891, 1.442695
    %v893 = vpow.pop %v892
    %v894 = vadd.f32 %v893, 1.0
    %v895 = vrcp.pop %v894
    %v896 = vmul.f32 1.0, %v895
    %v897 = vtanh.pop %v890
    %v898 = vmul.f32 %v896, %v705
    %900 = vrot.lane.b32.xlu0 %v897, 64
    %v901 = vpop.permute.xlu0 %900
    %v903 = vmul.f32 %v896, %v901
    %905 = vrot.lane.b32.xlu0 %v903, 32
    %v906 = vpop.permute.xlu0 %905
    %v908 = vadd.f32 %v898, %v906
    %v909 = vtanh.pop %v908
    %911 = vrot.lane.b32.xlu0 %v909, 64
    %v912 = vpop.permute.xlu0 %911
    %v914 = vmul.f32 %v896, %v912
    %916 = vrot.lane.b32.xlu0 %v914, 32
    %v917 = vpop.permute.xlu0 %916
    %920 = vrot.lane.b32.xlu0 %v817, 64
    %v921 = vpop.permute.xlu0 %920
    %v923 = vsel %vm247, %v917, %v921
    %v925 = vsel %vm106, %v923, 0
    %927 = vmatprep.subr.mxu0 0.0
    %928 = vmatpush1.msra.mxu0 %v498
    %929 = vmatprep.subr.mxu0 0.0
    %930 = vmatpush1.msra.mxu0 %v499
    %931 = vmatprep.subr.mxu0 0.0
    %932 = vmatpush1.msra.mxu0 %v500
    %933 = vmatprep.subr.mxu0 0.0
    %934 = vmatpush1.msra.mxu0 %v501
    %935 = vmatprep.subr.mxu0 0.0
    %936 = vmatpush1.msra.mxu0 %v502
    %937 = vmatprep.subr.mxu0 0.0
    %938 = vmatpush1.msra.mxu0 %v503
    %939 = vmatprep.subr.mxu0 0.0
    %940 = vmatpush1.msra.mxu0 %v504
    %941 = vmatprep.subr.mxu0 0.0
    %942 = vmatpush1.msra.mxu0 %v505
    %943 = vmatprep.subr.mxu0 0.0
    %944 = vmatpush1.msra.mxu0 0.0
    %945 = vmatprep.subr.mxu0 0.0
    %946 = vmatpush1.msra.mxu0 0.0
    %947 = vmatprep.subr.mxu0 0.0
    %948 = vmatpush1.msra.mxu0 0.0
    %949 = vmatprep.subr.mxu0 0.0
    %950 = vmatpush1.msra.mxu0 0.0
    %951 = vmatprep.subr.mxu0 0.0
    %952 = vmatpush1.msra.mxu0 0.0
    %953 = vmatprep.subr.mxu0 0.0
    %954 = vmatpush1.msra.mxu0 0.0
    %955 = vmatprep.subr.mxu0 0.0
    %956 = vmatpush1.msra.mxu0 0.0
    %957 = vmatprep.subr.mxu0 0.0
    %958 = vmatpush1.msra.mxu0 0.0
    %959 = vmatprep.subr.mxu0 0.0
    %960 = vmatpush1.msra.mxu0 0.0
    %961 = vmatprep.subr.mxu0 0.0
    %962 = vmatpush1.msra.mxu0 0.0
    %963 = vmatprep.subr.mxu0 0.0
    %964 = vmatpush1.msra.mxu0 0.0
    %965 = vmatprep.subr.mxu0 0.0
    %966 = vmatpush1.msra.mxu0 0.0
    %967 = vmatprep.subr.mxu0 0.0
    %968 = vmatpush1.msra.mxu0 0.0
    %969 = vmatprep.subr.mxu0 0.0
    %970 = vmatpush1.msra.mxu0 0.0
    %971 = vmatprep.subr.mxu0 0.0
    %972 = vmatpush1.msra.mxu0 0.0
    %973 = vmatprep.subr.mxu0 0.0
    %974 = vmatpush1.msra.mxu0 0.0
    %975 = vmatprep.subr.mxu0 0.0
    %976 = vmatpush1.msra.mxu0 0.0
    %977 = vmatprep.subr.mxu0 0.0
    %978 = vmatpush1.msra.mxu0 0.0
    %979 = vmatprep.subr.mxu0 0.0
    %980 = vmatpush1.msra.mxu0 0.0
    %981 = vmatprep.subr.mxu0 0.0
    %982 = vmatpush1.msra.mxu0 0.0
    %983 = vmatprep.subr.mxu0 0.0
    %984 = vmatpush1.msra.mxu0 0.0
    %985 = vmatprep.subr.mxu0 0.0
    %986 = vmatpush1.msra.mxu0 0.0
    %987 = vmatprep.subr.mxu0 0.0
    %988 = vmatpush1.msra.mxu0 0.0
    %989 = vmatprep.subr.mxu0 0.0
    %990 = vmatpush1.msra.mxu0 0.0
    %991 = vmatprep.mubr.f32.mxu0 0.0
    %992 = vmatmul.mubr.f32.gmra.mrb[0].mxu0 %v925
    %v993 = vpop.f32.mrb[0].mxu0
    %v994 = vadd.f32 %v512, %v993
    %v995 = vpop.f32.mrb[0].mxu0
    %996 = vdwg.mxu0
    %v997 = vxor.u32 %v994, 2147483648
    %v998 = vmul.f32 %v997, 1.442695
    %v999 = vpow.pop %v998
    %v1000 = vadd.f32 %v999, 1.0
    %v1001 = vrcp.pop %v1000
    %v1002 = vmul.f32 1.0, %v1001
    %v1003 = vtanh.pop %v994
    %v1004 = vmul.f32 %v1002, %v811
    %1006 = vrot.lane.b32.xlu0 %v1003, 64
    %v1007 = vpop.permute.xlu0 %1006
    %v1009 = vmul.f32 %v1002, %v1007
    %1011 = vrot.lane.b32.xlu0 %v1009, 32
    %v1012 = vpop.permute.xlu0 %1011
    %v1014 = vadd.f32 %v1004, %v1012
    %v1015 = vtanh.pop %v1014
    %1017 = vrot.lane.b32.xlu0 %v1015, 64
    %v1018 = vpop.permute.xlu0 %1017
    %v1020 = vmul.f32 %v1002, %v1018
    %v1021 = vsel %vm247, %v917, 0
    %1023 = vmatprep.subr.mxu0 0.0
    %1024 = vmatpush1.msra.mxu0 %v383
    %1025 = vmatprep.subr.mxu0 0.0
    %1026 = vmatpush1.msra.mxu0 %v384
    %1027 = vmatprep.subr.mxu0 0.0
    %1028 = vmatpush1.msra.mxu0 %v385
    %1029 = vmatprep.subr.mxu0 0.0
    %1030 = vmatpush1.msra.mxu0 %v386
    %1031 = vmatprep.subr.mxu0 0.0
    %1032 = vmatpush1.msra.mxu0 0.0
    %1033 = vmatprep.subr.mxu0 0.0
    %1034 = vmatpush1.msra.mxu0 0.0
    %1035 = vmatprep.subr.mxu0 0.0
    %1036 = vmatpush1.msra.mxu0 0.0
    %1037 = vmatprep.subr.mxu0 0.0
    %1038 = vmatpush1.msra.mxu0 0.0
    %1039 = vmatprep.subr.mxu0 0.0
    %1040 = vmatpush1.msra.mxu0 0.0
    %1041 = vmatprep.subr.mxu0 0.0
    %1042 = vmatpush1.msra.mxu0 0.0
    %1043 = vmatprep.subr.mxu0 0.0
    %1044 = vmatpush1.msra.mxu0 0.0
    %1045 = vmatprep.subr.mxu0 0.0
    %1046 = vmatpush1.msra.mxu0 0.0
    %1047 = vmatprep.subr.mxu0 0.0
    %1048 = vmatpush1.msra.mxu0 0.0
    %1049 = vmatprep.subr.mxu0 0.0
    %1050 = vmatpush1.msra.mxu0 0.0
    %1051 = vmatprep.subr.mxu0 0.0
    %1052 = vmatpush1.msra.mxu0 0.0
    %1053 = vmatprep.subr.mxu0 0.0
    %1054 = vmatpush1.msra.mxu0 0.0
    %1055 = vmatprep.subr.mxu0 0.0
    %1056 = vmatpush1.msra.mxu0 0.0
    %1057 = vmatprep.subr.mxu0 0.0
    %1058 = vmatpush1.msra.mxu0 0.0
    %1059 = vmatprep.subr.mxu0 0.0
    %1060 = vmatpush1.msra.mxu0 0.0
    %1061 = vmatprep.subr.mxu0 0.0
    %1062 = vmatpush1.msra.mxu0 0.0
    %1063 = vmatprep.subr.mxu0 0.0
    %1064 = vmatpush1.msra.mxu0 0.0
    %1065 = vmatprep.subr.mxu0 0.0
    %1066 = vmatpush1.msra.mxu0 0.0
    %1067 = vmatprep.subr.mxu0 0.0
    %1068 = vmatpush1.msra.mxu0 0.0
    %1069 = vmatprep.subr.mxu0 0.0
    %1070 = vmatpush1.msra.mxu0 0.0
    %1071 = vmatprep.subr.mxu0 0.0
    %1072 = vmatpush1.msra.mxu0 0.0
    %1073 = vmatprep.subr.mxu0 0.0
    %1074 = vmatpush1.msra.mxu0 0.0
    %1075 = vmatprep.subr.mxu0 0.0
    %1076 = vmatpush1.msra.mxu0 0.0
    %1077 = vmatprep.subr.mxu0 0.0
    %1078 = vmatpush1.msra.mxu0 0.0
    %1079 = vmatprep.subr.mxu0 0.0
    %1080 = vmatpush1.msra.mxu0 0.0
    %1081 = vmatprep.subr.mxu0 0.0
    %1082 = vmatpush1.msra.mxu0 0.0
    %1083 = vmatprep.subr.mxu0 0.0
    %1084 = vmatpush1.msra.mxu0 0.0
    %1085 = vmatprep.subr.mxu0 0.0
    %1086 = vmatpush1.msra.mxu0 0.0
    %1087 = vmatprep.mubr.f32.mxu0 0.0
    %1088 = vmatmul.mubr.f32.gmra.mrb[0].mxu0 %v1021
    %v1089 = vpop.f32.mrb[0].mxu0
    %v1090 = vadd.f32 0.0, %v1089
    %v1091 = vpop.f32.mrb[0].mxu0
    %1092 = vdwg.mxu0
    %v1093 = vadd.f32 %v354, %v1090
    %v1094 = vxor.u32 %v1093, 2147483648
    %v1095 = vmul.f32 %v1094, 1.442695
    %v1096 = vpow.pop %v1095
    %v1097 = vadd.f32 %v1096, 1.0
    %v1098 = vrcp.pop %v1097
    %v1099 = vmul.f32 1.0, %v1098
    %v1100 = vtanh.pop %v1093
    %v1101 = vmul.f32 %v1099, %v908
    %1103 = vrot.lane.b32.xlu0 %v1100, 64
    %v1104 = vpop.permute.xlu0 %1103
    %v1106 = vmul.f32 %v1099, %v1104
    %1108 = vrot.lane.b32.xlu0 %v1106, 32
    %v1109 = vpop.permute.xlu0 %1108
    %v1111 = vadd.f32 %v1101, %v1109
    %v1112 = vtanh.pop %v1111
    %1114 = vrot.lane.b32.xlu0 %v1112, 64
    %v1115 = vpop.permute.xlu0 %1114
    %v1117 = vmul.f32 %v1099, %v1115
    %1119 = vrot.lane.b32.xlu0 %v1117, 32
    %v1120 = vpop.permute.xlu0 %1119
    %1123 = vrot.lane.b32.xlu0 %v1020, 64
    %v1124 = vpop.permute.xlu0 %1123
    %v1126 = vsel %vm247, %v1120, %v1124
    %v1128 = vsel %vm106, %v1126, 0
    %1130 = vmatprep.subr.mxu0 0.0
    %1131 = vmatpush1.msra.mxu0 %v498
    %1132 = vmatprep.subr.mxu0 0.0
    %1133 = vmatpush1.msra.mxu0 %v499
    %1134 = vmatprep.subr.mxu0 0.0
    %1135 = vmatpush1.msra.mxu0 %v500
    %1136 = vmatprep.subr.mxu0 0.0
    %1137 = vmatpush1.msra.mxu0 %v501
    %1138 = vmatprep.subr.mxu0 0.0
    %1139 = vmatpush1.msra.mxu0 %v502
    %1140 = vmatprep.subr.mxu0 0.0
    %1141 = vmatpush1.msra.mxu0 %v503
    %1142 = vmatprep.subr.mxu0 0.0
    %1143 = vmatpush1.msra.mxu0 %v504
    %1144 = vmatprep.subr.mxu0 0.0
    %1145 = vmatpush1.msra.mxu0 %v505
    %1146 = vmatprep.subr.mxu0 0.0
    %1147 = vmatpush1.msra.mxu0 0.0
    %1148 = vmatprep.subr.mxu0 0.0
    %1149 = vmatpush1.msra.mxu0 0.0
    %1150 = vmatprep.subr.mxu0 0.0
    %1151 = vmatpush1.msra.mxu0 0.0
    %1152 = vmatprep.subr.mxu0 0.0
    %1153 = vmatpush1.msra.mxu0 0.0
    %1154 = vmatprep.subr.mxu0 0.0
    %1155 = vmatpush1.msra.mxu0 0.0
    %1156 = vmatprep.subr.mxu0 0.0
    %1157 = vmatpush1.msra.mxu0 0.0
    %1158 = vmatprep.subr.mxu0 0.0
    %1159 = vmatpush1.msra.mxu0 0.0
    %1160 = vmatprep.subr.mxu0 0.0
    %1161 = vmatpush1.msra.mxu0 0.0
    %1162 = vmatprep.subr.mxu0 0.0
    %1163 = vmatpush1.msra.mxu0 0.0
    %1164 = vmatprep.subr.mxu0 0.0
    %1165 = vmatpush1.msra.mxu0 0.0
    %1166 = vmatprep.subr.mxu0 0.0
    %1167 = vmatpush1.msra.mxu0 0.0
    %1168 = vmatprep.subr.mxu0 0.0
    %1169 = vmatpush1.msra.mxu0 0.0
    %1170 = vmatprep.subr.mxu0 0.0
    %1171 = vmatpush1.msra.mxu0 0.0
    %1172 = vmatprep.subr.mxu0 0.0
    %1173 = vmatpush1.msra.mxu0 0.0
    %1174 = vmatprep.subr.mxu0 0.0
    %1175 = vmatpush1.msra.mxu0 0.0
    %1176 = vmatprep.subr.mxu0 0.0
    %1177 = vmatpush1.msra.mxu0 0.0
    %1178 = vmatprep.subr.mxu0 0.0
    %1179 = vmatpush1.msra.mxu0 0.0
    %1180 = vmatprep.subr.mxu0 0.0
    %1181 = vmatpush1.msra.mxu0 0.0
    %1182 = vmatprep.subr.mxu0 0.0
    %1183 = vmatpush1.msra.mxu0 0.0
    %1184 = vmatprep.subr.mxu0 0.0
    %1185 = vmatpush1.msra.mxu0 0.0
    %1186 = vmatprep.subr.mxu0 0.0
    %1187 = vmatpush1.msra.mxu0 0.0
    %1188 = vmatprep.subr.mxu0 0.0
    %1189 = vmatpush1.msra.mxu0 0.0
    %1190 = vmatprep.subr.mxu0 0.0
    %1191 = vmatpush1.msra.mxu0 0.0
    %1192 = vmatprep.subr.mxu0 0.0
    %1193 = vmatpush1.msra.mxu0 0.0
    %1194 = vmatprep.mubr.f32.mxu0 0.0
    %1195 = vmatmul.mubr.f32.gmra.mrb[0].mxu0 %v1128
    %v1196 = vpop.f32.mrb[0].mxu0
    %v1197 = vadd.f32 %v512, %v1196
    %v1198 = vpop.f32.mrb[0].mxu0
    %1199 = vdwg.mxu0
    %v1200 = vxor.u32 %v1197, 2147483648
    %v1201 = vmul.f32 %v1200, 1.442695
    %v1202 = vpow.pop %v1201
    %v1203 = vadd.f32 %v1202, 1.0
    %v1204 = vrcp.pop %v1203
    %v1205 = vmul.f32 1.0, %v1204
    %v1206 = vtanh.pop %v1197
    %v1207 = vmul.f32 %v1205, %v1014
    %1209 = vrot.lane.b32.xlu0 %v1206, 64
    %v1210 = vpop.permute.xlu0 %1209
    %v1212 = vmul.f32 %v1205, %v1210
    %1214 = vrot.lane.b32.xlu0 %v1212, 32
    %v1215 = vpop.permute.xlu0 %1214
    %v1217 = vadd.f32 %v1207, %v1215
    %v1218 = vtanh.pop %v1217
    %1220 = vrot.lane.b32.xlu0 %v1218, 64
    %v1221 = vpop.permute.xlu0 %1220
    %v1223 = vmul.f32 %v1205, %v1221
    %v1224 = vsel %vm247, %v1120, 0
    %1226 = vmatprep.subr.mxu0 0.0
    %1227 = vmatpush1.msra.mxu0 %v383
    %1228 = vmatprep.subr.mxu0 0.0
    %1229 = vmatpush1.msra.mxu0 %v384
    %1230 = vmatprep.subr.mxu0 0.0
    %1231 = vmatpush1.msra.mxu0 %v385
    %1232 = vmatprep.subr.mxu0 0.0
    %1233 = vmatpush1.msra.mxu0 %v386
    %1234 = vmatprep.subr.mxu0 0.0
    %1235 = vmatpush1.msra.mxu0 0.0
    %1236 = vmatprep.subr.mxu0 0.0
    %1237 = vmatpush1.msra.mxu0 0.0
    %1238 = vmatprep.subr.mxu0 0.0
    %1239 = vmatpush1.msra.mxu0 0.0
    %1240 = vmatprep.subr.mxu0 0.0
    %1241 = vmatpush1.msra.mxu0 0.0
    %1242 = vmatprep.subr.mxu0 0.0
    %1243 = vmatpush1.msra.mxu0 0.0
    %1244 = vmatprep.subr.mxu0 0.0
    %1245 = vmatpush1.msra.mxu0 0.0
    %1246 = vmatprep.subr.mxu0 0.0
    %1247 = vmatpush1.msra.mxu0 0.0
    %1248 = vmatprep.subr.mxu0 0.0
    %1249 = vmatpush1.msra.mxu0 0.0
    %1250 = vmatprep.subr.mxu0 0.0
    %1251 = vmatpush1.msra.mxu0 0.0
    %1252 = vmatprep.subr.mxu0 0.0
    %1253 = vmatpush1.msra.mxu0 0.0
    %1254 = vmatprep.subr.mxu0 0.0
    %1255 = vmatpush1.msra.mxu0 0.0
    %1256 = vmatprep.subr.mxu0 0.0
    %1257 = vmatpush1.msra.mxu0 0.0
    %1258 = vmatprep.subr.mxu0 0.0
    %1259 = vmatpush1.msra.mxu0 0.0
    %1260 = vmatprep.subr.mxu0 0.0
    %1261 = vmatpush1.msra.mxu0 0.0
    %1262 = vmatprep.subr.mxu0 0.0
    %1263 = vmatpush1.msra.mxu0 0.0
    %1264 = vmatprep.subr.mxu0 0.0
    %1265 = vmatpush1.msra.mxu0 0.0
    %1266 = vmatprep.subr.mxu0 0.0
    %1267 = vmatpush1.msra.mxu0 0.0
    %1268 = vmatprep.subr.mxu0 0.0
    %1269 = vmatpush1.msra.mxu0 0.0
    %1270 = vmatprep.subr.mxu0 0.0
    %1271 = vmatpush1.msra.mxu0 0.0
    %1272 = vmatprep.subr.mxu0 0.0
    %1273 = vmatpush1.msra.mxu0 0.0
    %1274 = vmatprep.subr.mxu0 0.0
    %1275 = vmatpush1.msra.mxu0 0.0
    %1276 = vmatprep.subr.mxu0 0.0
    %1277 = vmatpush1.msra.mxu0 0.0
    %1278 = vmatprep.subr.mxu0 0.0
    %1279 = vmatpush1.msra.mxu0 0.0
    %1280 = vmatprep.subr.mxu0 0.0
    %1281 = vmatpush1.msra.mxu0 0.0
    %1282 = vmatprep.subr.mxu0 0.0
    %1283 = vmatpush1.msra.mxu0 0.0
    %1284 = vmatprep.subr.mxu0 0.0
    %1285 = vmatpush1.msra.mxu0 0.0
    %1286 = vmatprep.subr.mxu0 0.0
    %1287 = vmatpush1.msra.mxu0 0.0
    %1288 = vmatprep.subr.mxu0 0.0
    %1289 = vmatpush1.msra.mxu0 0.0
    %1290 = vmatprep.mubr.f32.mxu0 0.0
    %1291 = vmatmul.mubr.f32.gmra.mrb[0].mxu0 %v1224
    %v1292 = vpop.f32.mrb[0].mxu0
    %v1293 = vadd.f32 0.0, %v1292
    %v1294 = vpop.f32.mrb[0].mxu0
    %1295 = vdwg.mxu0
    %v1296 = vadd.f32 %v359, %v1293
    %v1297 = vxor.u32 %v1296, 2147483648
    %v1298 = vmul.f32 %v1297, 1.442695
    %v1299 = vpow.pop %v1298
    %v1300 = vadd.f32 %v1299, 1.0
    %v1301 = vrcp.pop %v1300
    %v1302 = vmul.f32 1.0, %v1301
    %v1303 = vtanh.pop %v1296
    %v1304 = vmul.f32 %v1302, %v1111
    %1306 = vrot.lane.b32.xlu0 %v1303, 64
    %v1307 = vpop.permute.xlu0 %1306
    %v1309 = vmul.f32 %v1302, %v1307
    %1311 = vrot.lane.b32.xlu0 %v1309, 32
    %v1312 = vpop.permute.xlu0 %1311
    %v1314 = vadd.f32 %v1304, %v1312
    %v1315 = vtanh.pop %v1314
    %1317 = vrot.lane.b32.xlu0 %v1315, 64
    %v1318 = vpop.permute.xlu0 %1317
    %v1320 = vmul.f32 %v1302, %v1318
    %1322 = vrot.lane.b32.xlu0 %v1320, 32
    %v1323 = vpop.permute.xlu0 %1322
    %1326 = vrot.lane.b32.xlu0 %v1223, 64
    %v1327 = vpop.permute.xlu0 %1326
    %v1329 = vsel %vm247, %v1323, %v1327
    %v1331 = vsel %vm106, %v1329, 0
    %1333 = vmatprep.subr.mxu0 0.0
    %1334 = vmatpush1.msra.mxu0 %v498
    %1335 = vmatprep.subr.mxu0 0.0
    %1336 = vmatpush1.msra.mxu0 %v499
    %1337 = vmatprep.subr.mxu0 0.0
    %1338 = vmatpush1.msra.mxu0 %v500
    %1339 = vmatprep.subr.mxu0 0.0
    %1340 = vmatpush1.msra.mxu0 %v501
    %1341 = vmatprep.subr.mxu0 0.0
    %1342 = vmatpush1.msra.mxu0 %v502
    %1343 = vmatprep.subr.mxu0 0.0
    %1344 = vmatpush1.msra.mxu0 %v503
    %1345 = vmatprep.subr.mxu0 0.0
    %1346 = vmatpush1.msra.mxu0 %v504
    %1347 = vmatprep.subr.mxu0 0.0
    %1348 = vmatpush1.msra.mxu0 %v505
    %1349 = vmatprep.subr.mxu0 0.0
    %1350 = vmatpush1.msra.mxu0 0.0
    %1351 = vmatprep.subr.mxu0 0.0
    %1352 = vmatpush1.msra.mxu0 0.0
    %1353 = vmatprep.subr.mxu0 0.0
    %1354 = vmatpush1.msra.mxu0 0.0
    %1355 = vmatprep.subr.mxu0 0.0
    %1356 = vmatpush1.msra.mxu0 0.0
    %1357 = vmatprep.subr.mxu0 0.0
    %1358 = vmatpush1.msra.mxu0 0.0
    %1359 = vmatprep.subr.mxu0 0.0
    %1360 = vmatpush1.msra.mxu0 0.0
    %1361 = vmatprep.subr.mxu0 0.0
    %1362 = vmatpush1.msra.mxu0 0.0
    %1363 = vmatprep.subr.mxu0 0.0
    %1364 = vmatpush1.msra.mxu0 0.0
    %1365 = vmatprep.subr.mxu0 0.0
    %1366 = vmatpush1.msra.mxu0 0.0
    %1367 = vmatprep.subr.mxu0 0.0
    %1368 = vmatpush1.msra.mxu0 0.0
    %1369 = vmatprep.subr.mxu0 0.0
    %1370 = vmatpush1.msra.mxu0 0.0
    %1371 = vmatprep.subr.mxu0 0.0
    %1372 = vmatpush1.msra.mxu0 0.0
    %1373 = vmatprep.subr.mxu0 0.0
    %1374 = vmatpush1.msra.mxu0 0.0
    %1375 = vmatprep.subr.mxu0 0.0
    %1376 = vmatpush1.msra.mxu0 0.0
    %1377 = vmatprep.subr.mxu0 0.0
    %1378 = vmatpush1.msra.mxu0 0.0
    %1379 = vmatprep.subr.mxu0 0.0
    %1380 = vmatpush1.msra.mxu0 0.0
    %1381 = vmatprep.subr.mxu0 0.0
    %1382 = vmatpush1.msra.mxu0 0.0
    %1383 = vmatprep.subr.mxu0 0.0
    %1384 = vmatpush1.msra.mxu0 0.0
    %1385 = vmatprep.subr.mxu0 0.0
    %1386 = vmatpush1.msra.mxu0 0.0
    %1387 = vmatprep.subr.mxu0 0.0
    %1388 = vmatpush1.msra.mxu0 0.0
    %1389 = vmatprep.subr.mxu0 0.0
    %1390 = vmatpush1.msra.mxu0 0.0
    %1391 = vmatprep.subr.mxu0 0.0
    %1392 = vmatpush1.msra.mxu0 0.0
    %1393 = vmatprep.subr.mxu0 0.0
    %1394 = vmatpush1.msra.mxu0 0.0
    %1395 = vmatprep.subr.mxu0 0.0
    %1396 = vmatpush1.msra.mxu0 0.0
    %1397 = vmatprep.mubr.f32.mxu0 0.0
    %1398 = vmatmul.mubr.f32.gmra.mrb[0].mxu0 %v1331
    %v1399 = vpop.f32.mrb[0].mxu0
    %v1400 = vadd.f32 %v512, %v1399
    %v1401 = vpop.f32.mrb[0].mxu0
    %1402 = vdwg.mxu0
    %v1403 = vxor.u32 %v1400, 2147483648
    %v1404 = vmul.f32 %v1403, 1.442695
    %v1405 = vpow.pop %v1404
    %v1406 = vadd.f32 %v1405, 1.0
    %v1407 = vrcp.pop %v1406
    %v1408 = vmul.f32 1.0, %v1407
    %v1409 = vtanh.pop %v1400
    %v1410 = vmul.f32 %v1408, %v1217
    %1412 = vrot.lane.b32.xlu0 %v1409, 64
    %v1413 = vpop.permute.xlu0 %1412
    %v1415 = vmul.f32 %v1408, %v1413
    %1417 = vrot.lane.b32.xlu0 %v1415, 32
    %v1418 = vpop.permute.xlu0 %1417
    %v1420 = vadd.f32 %v1410, %v1418
    %v1421 = vtanh.pop %v1420
    %1423 = vrot.lane.b32.xlu0 %v1421, 64
    %v1424 = vpop.permute.xlu0 %1423
    %v1426 = vmul.f32 %v1408, %v1424
    %v1427 = vsel %vm247, %v1323, 0
    %1429 = vmatprep.subr.mxu0 0.0
    %1430 = vmatpush1.msra.mxu0 %v383
    %1431 = vmatprep.subr.mxu0 0.0
    %1432 = vmatpush1.msra.mxu0 %v384
    %1433 = vmatprep.subr.mxu0 0.0
    %1434 = vmatpush1.msra.mxu0 %v385
    %1435 = vmatprep.subr.mxu0 0.0
    %1436 = vmatpush1.msra.mxu0 %v386
    %1437 = vmatprep.subr.mxu0 0.0
    %1438 = vmatpush1.msra.mxu0 0.0
    %1439 = vmatprep.subr.mxu0 0.0
    %1440 = vmatpush1.msra.mxu0 0.0
    %1441 = vmatprep.subr.mxu0 0.0
    %1442 = vmatpush1.msra.mxu0 0.0
    %1443 = vmatprep.subr.mxu0 0.0
    %1444 = vmatpush1.msra.mxu0 0.0
    %1445 = vmatprep.subr.mxu0 0.0
    %1446 = vmatpush1.msra.mxu0 0.0
    %1447 = vmatprep.subr.mxu0 0.0
    %1448 = vmatpush1.msra.mxu0 0.0
    %1449 = vmatprep.subr.mxu0 0.0
    %1450 = vmatpush1.msra.mxu0 0.0
    %1451 = vmatprep.subr.mxu0 0.0
    %1452 = vmatpush1.msra.mxu0 0.0
    %1453 = vmatprep.subr.mxu0 0.0
    %1454 = vmatpush1.msra.mxu0 0.0
    %1455 = vmatprep.subr.mxu0 0.0
    %1456 = vmatpush1.msra.mxu0 0.0
    %1457 = vmatprep.subr.mxu0 0.0
    %1458 = vmatpush1.msra.mxu0 0.0
    %1459 = vmatprep.subr.mxu0 0.0
    %1460 = vmatpush1.msra.mxu0 0.0
    %1461 = vmatprep.subr.mxu0 0.0
    %1462 = vmatpush1.msra.mxu0 0.0
    %1463 = vmatprep.subr.mxu0 0.0
    %1464 = vmatpush1.msra.mxu0 0.0
    %1465 = vmatprep.subr.mxu0 0.0
    %1466 = vmatpush1.msra.mxu0 0.0
    %1467 = vmatprep.subr.mxu0 0.0
    %1468 = vmatpush1.msra.mxu0 0.0
    %1469 = vmatprep.subr.mxu0 0.0
    %1470 = vmatpush1.msra.mxu0 0.0
    %1471 = vmatprep.subr.mxu0 0.0
    %1472 = vmatpush1.msra.mxu0 0.0
    %1473 = vmatprep.subr.mxu0 0.0
    %1474 = vmatpush1.msra.mxu0 0.0
    %1475 = vmatprep.subr.mxu0 0.0
    %1476 = vmatpush1.msra.mxu0 0.0
    %1477 = vmatprep.subr.mxu0 0.0
    %1478 = vmatpush1.msra.mxu0 0.0
    %1479 = vmatprep.subr.mxu0 0.0
    %1480 = vmatpush1.msra.mxu0 0.0
    %1481 = vmatprep.subr.mxu0 0.0
    %1482 = vmatpush1.msra.mxu0 0.0
    %1483 = vmatprep.subr.mxu0 0.0
    %1484 = vmatpush1.msra.mxu0 0.0
    %1485 = vmatprep.subr.mxu0 0.0
    %1486 = vmatpush1.msra.mxu0 0.0
    %1487 = vmatprep.subr.mxu0 0.0
    %1488 = vmatpush1.msra.mxu0 0.0
    %1489 = vmatprep.subr.mxu0 0.0
    %1490 = vmatpush1.msra.mxu0 0.0
    %1491 = vmatprep.subr.mxu0 0.0
    %1492 = vmatpush1.msra.mxu0 0.0
    %1493 = vmatprep.mubr.f32.mxu0 0.0
    %1494 = vmatmul.mubr.f32.gmra.mrb[0].mxu0 %v1427
    %v1495 = vpop.f32.mrb[0].mxu0
    %v1496 = vadd.f32 0.0, %v1495
    %v1497 = vpop.f32.mrb[0].mxu0
    %1498 = vdwg.mxu0
    %v1499 = vadd.f32 %v364, %v1496
    %v1500 = vxor.u32 %v1499, 2147483648
    %v1501 = vmul.f32 %v1500, 1.442695
    %v1502 = vpow.pop %v1501
    %v1503 = vadd.f32 %v1502, 1.0
    %v1504 = vrcp.pop %v1503
    %v1505 = vmul.f32 1.0, %v1504
    %v1506 = vtanh.pop %v1499
    %v1507 = vmul.f32 %v1505, %v1314
    %1509 = vrot.lane.b32.xlu0 %v1506, 64
    %v1510 = vpop.permute.xlu0 %1509
    %v1512 = vmul.f32 %v1505, %v1510
    %1514 = vrot.lane.b32.xlu0 %v1512, 32
    %v1515 = vpop.permute.xlu0 %1514
    %v1517 = vadd.f32 %v1507, %v1515
    %v1518 = vtanh.pop %v1517
    %1520 = vrot.lane.b32.xlu0 %v1518, 64
    %v1521 = vpop.permute.xlu0 %1520
    %v1523 = vmul.f32 %v1505, %v1521
    %1525 = vrot.lane.b32.xlu0 %v1523, 32
    %v1526 = vpop.permute.xlu0 %1525
    %1529 = vrot.lane.b32.xlu0 %v1426, 64
    %v1530 = vpop.permute.xlu0 %1529
    %v1532 = vsel %vm247, %v1526, %v1530
    %v1534 = vsel %vm106, %v1532, 0
    %1536 = vmatprep.subr.mxu0 0.0
    %1537 = vmatpush1.msra.mxu0 %v498
    %1538 = vmatprep.subr.mxu0 0.0
    %1539 = vmatpush1.msra.mxu0 %v499
    %1540 = vmatprep.subr.mxu0 0.0
    %1541 = vmatpush1.msra.mxu0 %v500
    %1542 = vmatprep.subr.mxu0 0.0
    %1543 = vmatpush1.msra.mxu0 %v501
    %1544 = vmatprep.subr.mxu0 0.0
    %1545 = vmatpush1.msra.mxu0 %v502
    %1546 = vmatprep.subr.mxu0 0.0
    %1547 = vmatpush1.msra.mxu0 %v503
    %1548 = vmatprep.subr.mxu0 0.0
    %1549 = vmatpush1.msra.mxu0 %v504
    %1550 = vmatprep.subr.mxu0 0.0
    %1551 = vmatpush1.msra.mxu0 %v505
    %1552 = vmatprep.subr.mxu0 0.0
    %1553 = vmatpush1.msra.mxu0 0.0
    %1554 = vmatprep.subr.mxu0 0.0
    %1555 = vmatpush1.msra.mxu0 0.0
    %1556 = vmatprep.subr.mxu0 0.0
    %1557 = vmatpush1.msra.mxu0 0.0
    %1558 = vmatprep.subr.mxu0 0.0
    %1559 = vmatpush1.msra.mxu0 0.0
    %1560 = vmatprep.subr.mxu0 0.0
    %1561 = vmatpush1.msra.mxu0 0.0
    %1562 = vmatprep.subr.mxu0 0.0
    %1563 = vmatpush1.msra.mxu0 0.0
    %1564 = vmatprep.subr.mxu0 0.0
    %1565 = vmatpush1.msra.mxu0 0.0
    %1566 = vmatprep.subr.mxu0 0.0
    %1567 = vmatpush1.msra.mxu0 0.0
    %1568 = vmatprep.subr.mxu0 0.0
    %1569 = vmatpush1.msra.mxu0 0.0
    %1570 = vmatprep.subr.mxu0 0.0
    %1571 = vmatpush1.msra.mxu0 0.0
    %1572 = vmatprep.subr.mxu0 0.0
    %1573 = vmatpush1.msra.mxu0 0.0
    %1574 = vmatprep.subr.mxu0 0.0
    %1575 = vmatpush1.msra.mxu0 0.0
    %1576 = vmatprep.subr.mxu0 0.0
    %1577 = vmatpush1.msra.mxu0 0.0
    %1578 = vmatprep.subr.mxu0 0.0
    %1579 = vmatpush1.msra.mxu0 0.0
    %1580 = vmatprep.subr.mxu0 0.0
    %1581 = vmatpush1.msra.mxu0 0.0
    %1582 = vmatprep.subr.mxu0 0.0
    %1583 = vmatpush1.msra.mxu0 0.0
    %1584 = vmatprep.subr.mxu0 0.0
    %1585 = vmatpush1.msra.mxu0 0.0
    %1586 = vmatprep.subr.mxu0 0.0
    %1587 = vmatpush1.msra.mxu0 0.0
    %1588 = vmatprep.subr.mxu0 0.0
    %1589 = vmatpush1.msra.mxu0 0.0
    %1590 = vmatprep.subr.mxu0 0.0
    %1591 = vmatpush1.msra.mxu0 0.0
    %1592 = vmatprep.subr.mxu0 0.0
    %1593 = vmatpush1.msra.mxu0 0.0
    %1594 = vmatprep.subr.mxu0 0.0
    %1595 = vmatpush1.msra.mxu0 0.0
    %1596 = vmatprep.subr.mxu0 0.0
    %1597 = vmatpush1.msra.mxu0 0.0
    %1598 = vmatprep.subr.mxu0 0.0
    %1599 = vmatpush1.msra.mxu0 0.0
    %1600 = vmatprep.mubr.f32.mxu0 0.0
    %1601 = vmatmul.mubr.f32.gmra.mrb[0].mxu0 %v1534
    %v1602 = vpop.f32.mrb[0].mxu0
    %v1603 = vadd.f32 %v512, %v1602
    %v1604 = vpop.f32.mrb[0].mxu0
    %1605 = vdwg.mxu0
    %v1606 = vxor.u32 %v1603, 2147483648
    %v1607 = vmul.f32 %v1606, 1.442695
    %v1608 = vpow.pop %v1607
    %v1609 = vadd.f32 %v1608, 1.0
    %v1610 = vrcp.pop %v1609
    %v1611 = vmul.f32 1.0, %v1610
    %v1612 = vtanh.pop %v1603
    %v1613 = vmul.f32 %v1611, %v1420
    %1615 = vrot.lane.b32.xlu0 %v1612, 64
    %v1616 = vpop.permute.xlu0 %1615
    %v1618 = vmul.f32 %v1611, %v1616
    %1620 = vrot.lane.b32.xlu0 %v1618, 32
    %v1621 = vpop.permute.xlu0 %1620
    %v1623 = vadd.f32 %v1613, %v1621
    %v1624 = vtanh.pop %v1623
    %1626 = vrot.lane.b32.xlu0 %v1624, 64
    %v1627 = vpop.permute.xlu0 %1626
    %v1629 = vmul.f32 %v1611, %v1627
    %v1630 = vsel %vm247, %v1526, 0
    %1632 = vmatprep.subr.mxu0 0.0
    %1633 = vmatpush1.msra.mxu0 %v383
    %1634 = vmatprep.subr.mxu0 0.0
    %1635 = vmatpush1.msra.mxu0 %v384
    %1636 = vmatprep.subr.mxu0 0.0
    %1637 = vmatpush1.msra.mxu0 %v385
    %1638 = vmatprep.subr.mxu0 0.0
    %1639 = vmatpush1.msra.mxu0 %v386
    %1640 = vmatprep.subr.mxu0 0.0
    %1641 = vmatpush1.msra.mxu0 0.0
    %1642 = vmatprep.subr.mxu0 0.0
    %1643 = vmatpush1.msra.mxu0 0.0
    %1644 = vmatprep.subr.mxu0 0.0
    %1645 = vmatpush1.msra.mxu0 0.0
    %1646 = vmatprep.subr.mxu0 0.0
    %1647 = vmatpush1.msra.mxu0 0.0
    %1648 = vmatprep.subr.mxu0 0.0
    %1649 = vmatpush1.msra.mxu0 0.0
    %1650 = vmatprep.subr.mxu0 0.0
    %1651 = vmatpush1.msra.mxu0 0.0
    %1652 = vmatprep.subr.mxu0 0.0
    %1653 = vmatpush1.msra.mxu0 0.0
    %1654 = vmatprep.subr.mxu0 0.0
    %1655 = vmatpush1.msra.mxu0 0.0
    %1656 = vmatprep.subr.mxu0 0.0
    %1657 = vmatpush1.msra.mxu0 0.0
    %1658 = vmatprep.subr.mxu0 0.0
    %1659 = vmatpush1.msra.mxu0 0.0
    %1660 = vmatprep.subr.mxu0 0.0
    %1661 = vmatpush1.msra.mxu0 0.0
    %1662 = vmatprep.subr.mxu0 0.0
    %1663 = vmatpush1.msra.mxu0 0.0
    %1664 = vmatprep.subr.mxu0 0.0
    %1665 = vmatpush1.msra.mxu0 0.0
    %1666 = vmatprep.subr.mxu0 0.0
    %1667 = vmatpush1.msra.mxu0 0.0
    %1668 = vmatprep.subr.mxu0 0.0
    %1669 = vmatpush1.msra.mxu0 0.0
    %1670 = vmatprep.subr.mxu0 0.0
    %1671 = vmatpush1.msra.mxu0 0.0
    %1672 = vmatprep.subr.mxu0 0.0
    %1673 = vmatpush1.msra.mxu0 0.0
    %1674 = vmatprep.subr.mxu0 0.0
    %1675 = vmatpush1.msra.mxu0 0.0
    %1676 = vmatprep.subr.mxu0 0.0
    %1677 = vmatpush1.msra.mxu0 0.0
    %1678 = vmatprep.subr.mxu0 0.0
    %1679 = vmatpush1.msra.mxu0 0.0
    %1680 = vmatprep.subr.mxu0 0.0
    %1681 = vmatpush1.msra.mxu0 0.0
    %1682 = vmatprep.subr.mxu0 0.0
    %1683 = vmatpush1.msra.mxu0 0.0
    %1684 = vmatprep.subr.mxu0 0.0
    %1685 = vmatpush1.msra.mxu0 0.0
    %1686 = vmatprep.subr.mxu0 0.0
    %1687 = vmatpush1.msra.mxu0 0.0
    %1688 = vmatprep.subr.mxu0 0.0
    %1689 = vmatpush1.msra.mxu0 0.0
    %1690 = vmatprep.subr.mxu0 0.0
    %1691 = vmatpush1.msra.mxu0 0.0
    %1692 = vmatprep.subr.mxu0 0.0
    %1693 = vmatpush1.msra.mxu0 0.0
    %1694 = vmatprep.subr.mxu0 0.0
    %1695 = vmatpush1.msra.mxu0 0.0
    %1696 = vmatprep.mubr.f32.mxu0 0.0
    %1697 = vmatmul.mubr.f32.gmra.mrb[0].mxu0 %v1630
    %v1698 = vpop.f32.mrb[0].mxu0
    %v1699 = vadd.f32 0.0, %v1698
    %v1700 = vpop.f32.mrb[0].mxu0
    %1701 = vdwg.mxu0
    %v1702 = vadd.f32 %v369, %v1699
    %v1703 = vxor.u32 %v1702, 2147483648
    %v1704 = vmul.f32 %v1703, 1.442695
    %v1705 = vpow.pop %v1704
    %v1706 = vadd.f32 %v1705, 1.0
    %v1707 = vrcp.pop %v1706
    %v1708 = vmul.f32 1.0, %v1707
    %v1709 = vtanh.pop %v1702
    %v1710 = vmul.f32 %v1708, %v1517
    %1712 = vrot.lane.b32.xlu0 %v1709, 64
    %v1713 = vpop.permute.xlu0 %1712
    %v1715 = vmul.f32 %v1708, %v1713
    %1717 = vrot.lane.b32.xlu0 %v1715, 32
    %v1718 = vpop.permute.xlu0 %1717
    %v1720 = vadd.f32 %v1710, %v1718
    %v1721 = vtanh.pop %v1720
    %1723 = vrot.lane.b32.xlu0 %v1721, 64
    %v1724 = vpop.permute.xlu0 %1723
    %v1726 = vmul.f32 %v1708, %v1724
    %1728 = vrot.lane.b32.xlu0 %v1726, 32
    %v1729 = vpop.permute.xlu0 %1728
    %1732 = vrot.lane.b32.xlu0 %v1629, 64
    %v1733 = vpop.permute.xlu0 %1732
    %v1735 = vsel %vm247, %v1729, %v1733
    %v1737 = vsel %vm106, %v1735, 0
    %1739 = vmatprep.subr.mxu0 0.0
    %1740 = vmatpush1.msra.mxu0 %v498
    %1741 = vmatprep.subr.mxu0 0.0
    %1742 = vmatpush1.msra.mxu0 %v499
    %1743 = vmatprep.subr.mxu0 0.0
    %1744 = vmatpush1.msra.mxu0 %v500
    %1745 = vmatprep.subr.mxu0 0.0
    %1746 = vmatpush1.msra.mxu0 %v501
    %1747 = vmatprep.subr.mxu0 0.0
    %1748 = vmatpush1.msra.mxu0 %v502
    %1749 = vmatprep.subr.mxu0 0.0
    %1750 = vmatpush1.msra.mxu0 %v503
    %1751 = vmatprep.subr.mxu0 0.0
    %1752 = vmatpush1.msra.mxu0 %v504
    %1753 = vmatprep.subr.mxu0 0.0
    %1754 = vmatpush1.msra.mxu0 %v505
    %1755 = vmatprep.subr.mxu0 0.0
    %1756 = vmatpush1.msra.mxu0 0.0
    %1757 = vmatprep.subr.mxu0 0.0
    %1758 = vmatpush1.msra.mxu0 0.0
    %1759 = vmatprep.subr.mxu0 0.0
    %1760 = vmatpush1.msra.mxu0 0.0
    %1761 = vmatprep.subr.mxu0 0.0
    %1762 = vmatpush1.msra.mxu0 0.0
    %1763 = vmatprep.subr.mxu0 0.0
    %1764 = vmatpush1.msra.mxu0 0.0
    %1765 = vmatprep.subr.mxu0 0.0
    %1766 = vmatpush1.msra.mxu0 0.0
    %1767 = vmatprep.subr.mxu0 0.0
    %1768 = vmatpush1.msra.mxu0 0.0
    %1769 = vmatprep.subr.mxu0 0.0
    %1770 = vmatpush1.msra.mxu0 0.0
    %1771 = vmatprep.subr.mxu0 0.0
    %1772 = vmatpush1.msra.mxu0 0.0
    %1773 = vmatprep.subr.mxu0 0.0
    %1774 = vmatpush1.msra.mxu0 0.0
    %1775 = vmatprep.subr.mxu0 0.0
    %1776 = vmatpush1.msra.mxu0 0.0
    %1777 = vmatprep.subr.mxu0 0.0
    %1778 = vmatpush1.msra.mxu0 0.0
    %1779 = vmatprep.subr.mxu0 0.0
    %1780 = vmatpush1.msra.mxu0 0.0
    %1781 = vmatprep.subr.mxu0 0.0
    %1782 = vmatpush1.msra.mxu0 0.0
    %1783 = vmatprep.subr.mxu0 0.0
    %1784 = vmatpush1.msra.mxu0 0.0
    %1785 = vmatprep.subr.mxu0 0.0
    %1786 = vmatpush1.msra.mxu0 0.0
    %1787 = vmatprep.subr.mxu0 0.0
    %1788 = vmatpush1.msra.mxu0 0.0
    %1789 = vmatprep.subr.mxu0 0.0
    %1790 = vmatpush1.msra.mxu0 0.0
    %1791 = vmatprep.subr.mxu0 0.0
    %1792 = vmatpush1.msra.mxu0 0.0
    %1793 = vmatprep.subr.mxu0 0.0
    %1794 = vmatpush1.msra.mxu0 0.0
    %1795 = vmatprep.subr.mxu0 0.0
    %1796 = vmatpush1.msra.mxu0 0.0
    %1797 = vmatprep.subr.mxu0 0.0
    %1798 = vmatpush1.msra.mxu0 0.0
    %1799 = vmatprep.subr.mxu0 0.0
    %1800 = vmatpush1.msra.mxu0 0.0
    %1801 = vmatprep.subr.mxu0 0.0
    %1802 = vmatpush1.msra.mxu0 0.0
    %1803 = vmatprep.mubr.f32.mxu0 0.0
    %1804 = vmatmul.mubr.f32.gmra.mrb[0].mxu0 %v1737
    %v1805 = vpop.f32.mrb[0].mxu0
    %v1806 = vadd.f32 %v512, %v1805
    %v1807 = vpop.f32.mrb[0].mxu0
    %1808 = vdwg.mxu0
    %v1809 = vxor.u32 %v1806, 2147483648
    %v1810 = vmul.f32 %v1809, 1.442695
    %v1811 = vpow.pop %v1810
    %v1812 = vadd.f32 %v1811, 1.0
    %v1813 = vrcp.pop %v1812
    %v1814 = vmul.f32 1.0, %v1813
    %v1815 = vtanh.pop %v1806
    %v1816 = vmul.f32 %v1814, %v1623
    %1818 = vrot.lane.b32.xlu0 %v1815, 64
    %v1819 = vpop.permute.xlu0 %1818
    %v1821 = vmul.f32 %v1814, %v1819
    %1823 = vrot.lane.b32.xlu0 %v1821, 32
    %v1824 = vpop.permute.xlu0 %1823
    %v1826 = vadd.f32 %v1816, %v1824
    %v1827 = vtanh.pop %v1826
    %1829 = vrot.lane.b32.xlu0 %v1827, 64
    %v1830 = vpop.permute.xlu0 %1829
    %v1832 = vmul.f32 %v1814, %v1830
    %v1833 = vsel %vm247, %v1729, 0
    %1835 = vmatprep.subr.mxu0 0.0
    %1836 = vmatpush1.msra.mxu0 %v383
    %1837 = vmatprep.subr.mxu0 0.0
    %1838 = vmatpush1.msra.mxu0 %v384
    %1839 = vmatprep.subr.mxu0 0.0
    %1840 = vmatpush1.msra.mxu0 %v385
    %1841 = vmatprep.subr.mxu0 0.0
    %1842 = vmatpush1.msra.mxu0 %v386
    %1843 = vmatprep.subr.mxu0 0.0
    %1844 = vmatpush1.msra.mxu0 0.0
    %1845 = vmatprep.subr.mxu0 0.0
    %1846 = vmatpush1.msra.mxu0 0.0
    %1847 = vmatprep.subr.mxu0 0.0
    %1848 = vmatpush1.msra.mxu0 0.0
    %1849 = vmatprep.subr.mxu0 0.0
    %1850 = vmatpush1.msra.mxu0 0.0
    %1851 = vmatprep.subr.mxu0 0.0
    %1852 = vmatpush1.msra.mxu0 0.0
    %1853 = vmatprep.subr.mxu0 0.0
    %1854 = vmatpush1.msra.mxu0 0.0
    %1855 = vmatprep.subr.mxu0 0.0
    %1856 = vmatpush1.msra.mxu0 0.0
    %1857 = vmatprep.subr.mxu0 0.0
    %1858 = vmatpush1.msra.mxu0 0.0
    %1859 = vmatprep.subr.mxu0 0.0
    %1860 = vmatpush1.msra.mxu0 0.0
    %1861 = vmatprep.subr.mxu0 0.0
    %1862 = vmatpush1.msra.mxu0 0.0
    %1863 = vmatprep.subr.mxu0 0.0
    %1864 = vmatpush1.msra.mxu0 0.0
    %1865 = vmatprep.subr.mxu0 0.0
    %1866 = vmatpush1.msra.mxu0 0.0
    %1867 = vmatprep.subr.mxu0 0.0
    %1868 = vmatpush1.msra.mxu0 0.0
    %1869 = vmatprep.subr.mxu0 0.0
    %1870 = vmatpush1.msra.mxu0 0.0
    %1871 = vmatprep.subr.mxu0 0.0
    %1872 = vmatpush1.msra.mxu0 0.0
    %1873 = vmatprep.subr.mxu0 0.0
    %1874 = vmatpush1.msra.mxu0 0.0
    %1875 = vmatprep.subr.mxu0 0.0
    %1876 = vmatpush1.msra.mxu0 0.0
    %1877 = vmatprep.subr.mxu0 0.0
    %1878 = vmatpush1.msra.mxu0 0.0
    %1879 = vmatprep.subr.mxu0 0.0
    %1880 = vmatpush1.msra.mxu0 0.0
    %1881 = vmatprep.subr.mxu0 0.0
    %1882 = vmatpush1.msra.mxu0 0.0
    %1883 = vmatprep.subr.mxu0 0.0
    %1884 = vmatpush1.msra.mxu0 0.0
    %1885 = vmatprep.subr.mxu0 0.0
    %1886 = vmatpush1.msra.mxu0 0.0
    %1887 = vmatprep.subr.mxu0 0.0
    %1888 = vmatpush1.msra.mxu0 0.0
    %1889 = vmatprep.subr.mxu0 0.0
    %1890 = vmatpush1.msra.mxu0 0.0
    %1891 = vmatprep.subr.mxu0 0.0
    %1892 = vmatpush1.msra.mxu0 0.0
    %1893 = vmatprep.subr.mxu0 0.0
    %1894 = vmatpush1.msra.mxu0 0.0
    %1895 = vmatprep.subr.mxu0 0.0
    %1896 = vmatpush1.msra.mxu0 0.0
    %1897 = vmatprep.subr.mxu0 0.0
    %1898 = vmatpush1.msra.mxu0 0.0
    %1899 = vmatprep.mubr.f32.mxu0 0.0
    %1900 = vmatmul.mubr.f32.gmra.mrb[0].mxu0 %v1833
    %v1901 = vpop.f32.mrb[0].mxu0
    %v1902 = vadd.f32 0.0, %v1901
    %v1903 = vpop.f32.mrb[0].mxu0
    %1904 = vdwg.mxu0
    %v1905 = vadd.f32 %v374, %v1902
    %v1906 = vxor.u32 %v1905, 2147483648
    %v1907 = vmul.f32 %v1906, 1.442695
    %v1908 = vpow.pop %v1907
    %v1909 = vadd.f32 %v1908, 1.0
    %v1910 = vrcp.pop %v1909
    %v1911 = vmul.f32 1.0, %v1910
    %v1912 = vtanh.pop %v1905
    %v1913 = vmul.f32 %v1911, %v1720
    %1915 = vrot.lane.b32.xlu0 %v1912, 64
    %v1916 = vpop.permute.xlu0 %1915
    %v1918 = vmul.f32 %v1911, %v1916
    %1920 = vrot.lane.b32.xlu0 %v1918, 32
    %v1921 = vpop.permute.xlu0 %1920
    %v1923 = vadd.f32 %v1913, %v1921
    %v1924 = vtanh.pop %v1923
    %1926 = vrot.lane.b32.xlu0 %v1924, 64
    %v1927 = vpop.permute.xlu0 %1926
    %v1929 = vmul.f32 %v1911, %v1927
    %1931 = vrot.lane.b32.xlu0 %v1929, 32
    %v1932 = vpop.permute.xlu0 %1931
    %1935 = vrot.lane.b32.xlu0 %v1832, 64
    %v1936 = vpop.permute.xlu0 %1935
    %v1938 = vsel %vm247, %v1932, %v1936
    %v1940 = vsel %vm106, %v1938, 0
    %1942 = vmatprep.subr.mxu0 0.0
    %1943 = vmatpush1.msra.mxu0 %v498
    %1944 = vmatprep.subr.mxu0 0.0
    %1945 = vmatpush1.msra.mxu0 %v499
    %1946 = vmatprep.subr.mxu0 0.0
    %1947 = vmatpush1.msra.mxu0 %v500
    %1948 = vmatprep.subr.mxu0 0.0
    %1949 = vmatpush1.msra.mxu0 %v501
    %1950 = vmatprep.subr.mxu0 0.0
    %1951 = vmatpush1.msra.mxu0 %v502
    %1952 = vmatprep.subr.mxu0 0.0
    %1953 = vmatpush1.msra.mxu0 %v503
    %1954 = vmatprep.subr.mxu0 0.0
    %1955 = vmatpush1.msra.mxu0 %v504
    %1956 = vmatprep.subr.mxu0 0.0
    %1957 = vmatpush1.msra.mxu0 %v505
    %1958 = vmatprep.subr.mxu0 0.0
    %1959 = vmatpush1.msra.mxu0 0.0
    %1960 = vmatprep.subr.mxu0 0.0
    %1961 = vmatpush1.msra.mxu0 0.0
    %1962 = vmatprep.subr.mxu0 0.0
    %1963 = vmatpush1.msra.mxu0 0.0
    %1964 = vmatprep.subr.mxu0 0.0
    %1965 = vmatpush1.msra.mxu0 0.0
    %1966 = vmatprep.subr.mxu0 0.0
    %1967 = vmatpush1.msra.mxu0 0.0
    %1968 = vmatprep.subr.mxu0 0.0
    %1969 = vmatpush1.msra.mxu0 0.0
    %1970 = vmatprep.subr.mxu0 0.0
    %1971 = vmatpush1.msra.mxu0 0.0
    %1972 = vmatprep.subr.mxu0 0.0
    %1973 = vmatpush1.msra.mxu0 0.0
    %1974 = vmatprep.subr.mxu0 0.0
    %1975 = vmatpush1.msra.mxu0 0.0
    %1976 = vmatprep.subr.mxu0 0.0
    %1977 = vmatpush1.msra.mxu0 0.0
    %1978 = vmatprep.subr.mxu0 0.0
    %1979 = vmatpush1.msra.mxu0 0.0
    %1980 = vmatprep.subr.mxu0 0.0
    %1981 = vmatpush1.msra.mxu0 0.0
    %1982 = vmatprep.subr.mxu0 0.0
    %1983 = vmatpush1.msra.mxu0 0.0
    %1984 = vmatprep.subr.mxu0 0.0
    %1985 = vmatpush1.msra.mxu0 0.0
    %1986 = vmatprep.subr.mxu0 0.0
    %1987 = vmatpush1.msra.mxu0 0.0
    %1988 = vmatprep.subr.mxu0 0.0
    %1989 = vmatpush1.msra.mxu0 0.0
    %1990 = vmatprep.subr.mxu0 0.0
    %1991 = vmatpush1.msra.mxu0 0.0
    %1992 = vmatprep.subr.mxu0 0.0
    %1993 = vmatpush1.msra.mxu0 0.0
    %1994 = vmatprep.subr.mxu0 0.0
    %1995 = vmatpush1.msra.mxu0 0.0
    %1996 = vmatprep.subr.mxu0 0.0
    %1997 = vmatpush1.msra.mxu0 0.0
    %1998 = vmatprep.subr.mxu0 0.0
    %1999 = vmatpush1.msra.mxu0 0.0
    %2000 = vmatprep.subr.mxu0 0.0
    %2001 = vmatpush1.msra.mxu0 0.0
    %2002 = vmatprep.subr.mxu0 0.0
    %2003 = vmatpush1.msra.mxu0 0.0
    %2004 = vmatprep.subr.mxu0 0.0
    %2005 = vmatpush1.msra.mxu0 0.0
    %2006 = vmatprep.mubr.f32.mxu0 0.0
    %2007 = vmatmul.mubr.f32.gmra.mrb[0].mxu0 %v1940
    %v2008 = vpop.f32.mrb[0].mxu0
    %v2009 = vadd.f32 %v512, %v2008
    %v2010 = vpop.f32.mrb[0].mxu0
    %2011 = vdwg.mxu0
    %v2012 = vxor.u32 %v2009, 2147483648
    %v2013 = vmul.f32 %v2012, 1.442695
    %v2014 = vpow.pop %v2013
    %v2015 = vadd.f32 %v2014, 1.0
    %v2016 = vrcp.pop %v2015
    %v2017 = vmul.f32 1.0, %v2016
    %v2018 = vtanh.pop %v2009
    %v2019 = vmul.f32 %v2017, %v1826
    %2021 = vrot.lane.b32.xlu0 %v2018, 64
    %v2022 = vpop.permute.xlu0 %2021
    %v2024 = vmul.f32 %v2017, %v2022
    %2026 = vrot.lane.b32.xlu0 %v2024, 32
    %v2027 = vpop.permute.xlu0 %2026
    %v2029 = vadd.f32 %v2019, %v2027
    %v2030 = vtanh.pop %v2029
    %2032 = vrot.lane.b32.xlu0 %v2030, 64
    %v2033 = vpop.permute.xlu0 %2032
    %v2035 = vmul.f32 %v2017, %v2033
    %v2036 = vld [vmem:[%s8] sm:$0xff]
    %v2037 = vld [vmem:[%s8 + $0x8] sm:$0xff]
    %v2038 = vld [vmem:[%s8 + $0x10] sm:$0xff]
    %v2039 = vld [vmem:[%s8 + $0x18] sm:$0xff]
    %v2040 = vld [vmem:[%s9] sm:$0x1]
    %v2042 = vlaneseq
    %v2043 = vshrl.u32 %v2042, 7
    %v2044 = vsub.s32 0, %v2043
    %v2045 = vrot.slane %v2040, %v2044
    %2048 = vrot.lane.b32.xlu0 %v2035, 32
    %v2049 = vpop.permute.xlu0 %2048
    %v2050 = vsel %vm247, %v2049, 0
    %2052 = vmatprep.subr.mxu0 0.0
    %2053 = vmatpush1.msra.mxu0 %v2036
    %2054 = vmatprep.subr.mxu0 0.0
    %2055 = vmatpush1.msra.mxu0 %v2037
    %2056 = vmatprep.subr.mxu0 0.0
    %2057 = vmatpush1.msra.mxu0 %v2038
    %2058 = vmatprep.subr.mxu0 0.0
    %2059 = vmatpush1.msra.mxu0 %v2039
    %2060 = vmatprep.subr.mxu0 0.0
    %2061 = vmatpush1.msra.mxu0 0.0
    %2062 = vmatprep.subr.mxu0 0.0
    %2063 = vmatpush1.msra.mxu0 0.0
    %2064 = vmatprep.subr.mxu0 0.0
    %2065 = vmatpush1.msra.mxu0 0.0
    %2066 = vmatprep.subr.mxu0 0.0
    %2067 = vmatpush1.msra.mxu0 0.0
    %2068 = vmatprep.subr.mxu0 0.0
    %2069 = vmatpush1.msra.mxu0 0.0
    %2070 = vmatprep.subr.mxu0 0.0
    %2071 = vmatpush1.msra.mxu0 0.0
    %2072 = vmatprep.subr.mxu0 0.0
    %2073 = vmatpush1.msra.mxu0 0.0
    %2074 = vmatprep.subr.mxu0 0.0
    %2075 = vmatpush1.msra.mxu0 0.0
    %2076 = vmatprep.subr.mxu0 0.0
    %2077 = vmatpush1.msra.mxu0 0.0
    %2078 = vmatprep.subr.mxu0 0.0
    %2079 = vmatpush1.msra.mxu0 0.0
    %2080 = vmatprep.subr.mxu0 0.0
    %2081 = vmatpush1.msra.mxu0 0.0
    %2082 = vmatprep.subr.mxu0 0.0
    %2083 = vmatpush1.msra.mxu0 0.0
    %2084 = vmatprep.subr.mxu0 0.0
    %2085 = vmatpush1.msra.mxu0 0.0
    %2086 = vmatprep.subr.mxu0 0.0
    %2087 = vmatpush1.msra.mxu0 0.0
    %2088 = vmatprep.subr.mxu0 0.0
    %2089 = vmatpush1.msra.mxu0 0.0
    %2090 = vmatprep.subr.mxu0 0.0
    %2091 = vmatpush1.msra.mxu0 0.0
    %2092 = vmatprep.subr.mxu0 0.0
    %2093 = vmatpush1.msra.mxu0 0.0
    %2094 = vmatprep.subr.mxu0 0.0
    %2095 = vmatpush1.msra.mxu0 0.0
    %2096 = vmatprep.subr.mxu0 0.0
    %2097 = vmatpush1.msra.mxu0 0.0
    %2098 = vmatprep.subr.mxu0 0.0
    %2099 = vmatpush1.msra.mxu0 0.0
    %2100 = vmatprep.subr.mxu0 0.0
    %2101 = vmatpush1.msra.mxu0 0.0
    %2102 = vmatprep.subr.mxu0 0.0
    %2103 = vmatpush1.msra.mxu0 0.0
    %2104 = vmatprep.subr.mxu0 0.0
    %2105 = vmatpush1.msra.mxu0 0.0
    %2106 = vmatprep.subr.mxu0 0.0
    %2107 = vmatpush1.msra.mxu0 0.0
    %2108 = vmatprep.subr.mxu0 0.0
    %2109 = vmatpush1.msra.mxu0 0.0
    %2110 = vmatprep.subr.mxu0 0.0
    %2111 = vmatpush1.msra.mxu0 0.0
    %2112 = vmatprep.subr.mxu0 0.0
    %2113 = vmatpush1.msra.mxu0 0.0
    %2114 = vmatprep.subr.mxu0 0.0
    %2115 = vmatpush1.msra.mxu0 0.0
    %2116 = vmatprep.mubr.f32.mxu0 0.0
    %2117 = vmatmul.mubr.f32.gmra.mrb[0].mxu0 %v2050
    %v2118 = vpop.f32.mrb[0].mxu0
    %v2119 = vadd.f32 %v2045, %v2118
    %v2120 = vpop.f32.mrb[0].mxu0
    %2121 = vdwg.mxu0
    %vm2122 = vcmask 64512
    %v2123 = vsel %vm2122, %v2119, -inf
    %2124 = vmax.xlane.f32.xlu0 %v2123
    %v2125 = vpop.xlane.xlu0 %2124
    %v2126 = vsub.f32 %v2119, %v2125
    %v2127 = vmul.f32 %v2126, 1.442695
    %v2128 = vpow.pop %v2127
    %v2129 = vsel %vm2122, %v2128, 0.0
    %2130 = vadd.xlane.f32.xlu0 %v2129
    %v2131 = vpop.xlane.xlu0 %2130
    %v2132 = vrcp.pop %v2131
    %v2133 = vmul.f32 %v2128, %v2132
    %2134 = vst.msk [vmem:[#allocation2] sm:$0xff] %vm2122, %v2133
    %2135 = vst.msk [vmem:[#allocation4] sm:$0xff] %vm247, %v1932
    %2137 = vrot.lane.b32.xlu0 %v1923, 96
    %v2138 = vpop.permute.xlu0 %2137
    %2140 = vst.msk [vmem:[#allocation6] sm:$0xff] %vm247, %v2138
    %s2142 = scalar_lea.vmem [#allocation4], 8
    %2143 = vst.msk [vmem:[%s2142] sm:$0xff] %vm247, %v2049
    %2145 = vrot.lane.b32.xlu0 %v2029, 96
    %v2146 = vpop.permute.xlu0 %2145
    %s2148 = scalar_lea.vmem [#allocation6], 8
    %2149 = vst.msk [vmem:[%s2148] sm:$0xff] %vm247, %v2146
    // Predicated region
    $region42: #{bert_plus_rnn_forward.1} parent=1 // pred_check
      _
    $region43: #{bert_plus_rnn_forward.1} parent=1 // pred_check_branch
      %2151 = sbr.rel (0) target = $region45
    $region44: #{bert_plus_rnn_forward.1} parent=1 // pred_region
      %s2153 = ssub.s32 128, 128
      %2154 = vsyncadd [#allocation3], %s2153
      %s2156 = sshll.u32 [#allocation2], 4
      %s2157 = int_to_ptr.vmem [resolvable:$true] %s2156
      %2159 = dma.vmem_to_hbm [thread:$0]  %s2157, 128, %s10, [#allocation3]
    $region45: #{bert_plus_rnn_forward.1} parent=1 // pred_fallthru
      _
    // Predicated region
    $region46: #{bert_plus_rnn_forward.1} parent=1 // pred_check
      _
    $region47: #{bert_plus_rnn_forward.1} parent=1 // pred_check_branch
      %2161 = sbr.rel (0) target = $region49
    $region48: #{bert_plus_rnn_forward.1} parent=1 // pred_region
      %s2163 = ssub.s32 256, 256
      %2164 = vsyncadd [#allocation5], %s2163
      %s2165 = sshll.u32 [#allocation4], 4
      %s2166 = int_to_ptr.vmem [resolvable:$true] %s2165
      %2171 = dma.vmem_to_hbm [thread:$0]  %s2166, 256, %s11, [#allocation5], 128, 128, 8
    $region49: #{bert_plus_rnn_forward.1} parent=1 // pred_fallthru
      _
    // Predicated region
    $region50: #{bert_plus_rnn_forward.1} parent=1 // pred_check
      _
    $region51: #{bert_plus_rnn_forward.1} parent=1 // pred_check_branch
      %2173 = sbr.rel (0) target = $region53
    $region52: #{bert_plus_rnn_forward.1} parent=1 // pred_region
      %s2175 = ssub.s32 256, 256
      %2176 = vsyncadd [#allocation5], %s2175
      %s2177 = sshll.u32 [#allocation6], 4
      %s2178 = int_to_ptr.vmem [resolvable:$true] %s2177
      %2183 = dma.vmem_to_hbm [thread:$0]  %s2178, 256, %s12, [#allocation5], 128, 128, 8
    $region53: #{bert_plus_rnn_forward.1} parent=1 // pred_fallthru
      _
    // Predicated region
    $region54: #{bert_plus_rnn_forward.1} parent=1 // pred_check
      _
    $region55: #{bert_plus_rnn_forward.1} parent=1 // pred_check_branch
      %2185 = sbr.rel (0) target = $region57
    $region56: #{bert_plus_rnn_forward.1} parent=1 // pred_region
      %2186 = dma.done [#allocation3], 128
    $region57: #{bert_plus_rnn_forward.1} parent=1 // pred_fallthru
      _
    // Predicated region
    $region58: #{bert_plus_rnn_forward.1} parent=1 // pred_check
      _
    $region59: #{bert_plus_rnn_forward.1} parent=1 // pred_check_branch
      %2188 = sbr.rel (0) target = $region61
    $region60: #{bert_plus_rnn_forward.1} parent=1 // pred_region
      %2189 = dma.done [#allocation5], 256
    $region61: #{bert_plus_rnn_forward.1} parent=1 // pred_fallthru
      _
    // Predicated region
    $region62: #{bert_plus_rnn_forward.1} parent=1 // pred_check
      _
    $region63: #{bert_plus_rnn_forward.1} parent=1 // pred_check_branch
      %2191 = sbr.rel (0) target = $region65
    $region64: #{bert_plus_rnn_forward.1} parent=1 // pred_region
      %2192 = dma.done [#allocation5], 256
    $region65: #{bert_plus_rnn_forward.1} parent=1 // pred_fallthru
      _
    %2193 = vsyncpa [#allocation3], 1
    %2194 = vsyncpa [#allocation5], 1

</llo_original>
